<compile_context>
chip_gen: v7x
topology: tpu7x:2x2x1
jax: 0.10.0
libtpu: 0.0.40
codegen_flags: <defaults>
</compile_context>

<pallas_src>
import functools

import jax
import jax.numpy as jnp
from jax.experimental import pallas as pl
from jax.experimental.pallas import tpu as pltpu

BN_EPS = 1e-5
IN_FEATURES = 512
HIDDEN = 1024


def _round_up(x, m):
    return ((x + m - 1) // m) * m


# ----------------------------------------------------------------------------
# Kernel
# ----------------------------------------------------------------------------
def evaluator_kernel(
    x_ref,        # (TB, 512)          f32 flattened features (batch tile)
    wcat_ref,     # (512, 1024 + Cp)   bf16 [W1 with BN folded | W3 lane-padded]
    b1_ref,       # (1, 1024)          f32 folded BN bias
    w2_ref,       # (1024, Cp)         bf16 Linear(1024->C) weight (lane-padded)
    b2_ref,       # (1, Cp)            f32
    b3_ref,       # (1, Cp)            f32
    mlp_out_ref,  # (TB, Cp)           bf16 lgt_glb_mlp (padded)
    lin_out_ref,  # (TB, Cp)           bf16 lgt_glb_lin (padded)
):
    # Cast activations in-kernel (saves an XLA launch / HBM round-trip on x).
    x = x_ref[...].astype(jnp.bfloat16)

    # Single MXU pass over K=512 serves both heads.
    hcat = jnp.dot(x, wcat_ref[...], preferred_element_type=jnp.float32)

    # ---- block_glb_mlp path (BN already folded into W1/b1) ----
    h = jnp.maximum(hcat[:, :HIDDEN] + b1_ref[...], 0.0)
    mlp = jnp.dot(h.astype(jnp.bfloat16), w2_ref[...],
                  preferred_element_type=jnp.float32) + b2_ref[...]
    mlp_out_ref[...] = mlp.astype(mlp_out_ref.dtype)

    # ---- block_glb_lin path (its logits ride along in the fused matmul) ----
    lin_out_ref[...] = (hcat[:, HIDDEN:] + b3_ref[...]).astype(lin_out_ref.dtype)


# ----------------------------------------------------------------------------
# One-time parameter packing (call once, cache the result)
# ----------------------------------------------------------------------------
def prepare_params(params):
    """Fold BN into W1, fuse the two K=512 heads, pad class dim to 128 lanes,
    cast weights to bf16. Runs ONCE; its outputs are reused by every forward."""
    C = params["w2"].shape[1]
    Cp = _round_up(C, 128)

    scale = params["bn_gamma"] * jax.lax.rsqrt(params["bn_var"] + BN_EPS)  # (1,1024)
    w1_folded = params["w1"] * scale                                       # (512,1024)
    b1 = params["bn_beta"] - params["bn_mean"] * scale                     # (1,1024)

    w2_p = jnp.zeros((HIDDEN, Cp), jnp.float32).at[:, :C].set(params["w2"])
    b2_p = jnp.zeros((1, Cp), jnp.float32).at[:, :C].set(params["b2"])
    w3_p = jnp.zeros((IN_FEATURES, Cp), jnp.float32).at[:, :C].set(params["w3"])
    b3_p = jnp.zeros((1, Cp), jnp.float32).at[:, :C].set(params["b3"])

    # Fuse the two K=512 matmuls into one weight: (512, 1024 + Cp).
    # TODO(synk): on v5e/v6e, per-output-channel int8 weights (fp8 on v7x) would
    # halve the weight HBM bytes that dominate small-batch traffic; kept bf16.
    w_cat = jnp.concatenate([w1_folded, w3_p], axis=1).astype(jnp.bfloat16)

    packed = dict(
        w_cat=w_cat,                      # (512, 1024+Cp) bf16
        b1=b1.astype(jnp.float32),        # (1, 1024)      f32
        w2=w2_p.astype(jnp.bfloat16),     # (1024, Cp)     bf16
        b2=b2_p,                          # (1, Cp)        f32
        b3=b3_p,                          # (1, Cp)        f32
    )
    return jax.block_until_ready(packed)


# ----------------------------------------------------------------------------
# Jitted forward (only pads x and launches the kernel)
# ----------------------------------------------------------------------------
@functools.partial(jax.jit, static_argnames=("n_classes",))
def evaluator_forward(ftr_1, packed, n_classes):
    """ftr_1: (B, 512, 1, 1) NCHW features. Returns (lgt_glb_mlp, lgt_glb_lin)."""
    B = ftr_1.shape[0]
    x = ftr_1.reshape(B, -1).astype(jnp.float32)  # flatten + detach (no-op)
    assert x.shape[1] == IN_FEATURES

    Cp = packed["w2"].shape[1]
    Hcat = HIDDEN + Cp
    C = n_classes

    # Batch tile: multiple of 16 (bf16 packs 2 rows/sublane), capped at 256 so
    # the grid pipelines input DMA / output writeback against the MXU and VMEM
    # use stays independent of B (safe on v7x's smaller VMEM).
    TB = min(256, _round_up(B, 16))
    Bp = _round_up(B, TB)
    x_p = jnp.pad(x, ((0, Bp - B), (0, 0))) if Bp != B else x
    n_tiles = Bp // TB

    const2 = lambda i: (0, 0)   # weights/biases resident across batch tiles
    batch2 = lambda i: (i, 0)

    in_specs = [
        pl.BlockSpec((TB, IN_FEATURES), batch2),
        pl.BlockSpec((IN_FEATURES, Hcat), const2),
        pl.BlockSpec((1, HIDDEN), const2),
        pl.BlockSpec((HIDDEN, Cp), const2),
        pl.BlockSpec((1, Cp), const2),
        pl.BlockSpec((1, Cp), const2),
    ]
    out_specs = (
        pl.BlockSpec((TB, Cp), batch2),
        pl.BlockSpec((TB, Cp), batch2),
    )
    out_shapes = (
        jax.ShapeDtypeStruct((Bp, Cp), jnp.bfloat16),
        jax.ShapeDtypeStruct((Bp, Cp), jnp.bfloat16),
    )

    mlp_pad, lin_pad = pl.pallas_call(
        evaluator_kernel,
        out_shape=out_shapes,
        grid_spec=pltpu.PrefetchScalarGridSpec(
            num_scalar_prefetch=0,
            grid=(n_tiles,),
            in_specs=in_specs,
            out_specs=out_specs,
        ),
        compiler_params=pltpu.CompilerParams(
            dimension_semantics=("parallel",),
            vmem_limit_bytes=32 * 1024 * 1024,
        ),
    )(x_p, packed["w_cat"], packed["b1"], packed["w2"], packed["b2"], packed["b3"])

    return (mlp_pad[:B, :C].astype(jnp.float32),
            lin_pad[:B, :C].astype(jnp.float32))


# ----------------------------------------------------------------------------
# Synthetic parameters + pure-JAX reference
# ----------------------------------------------------------------------------
def init_params(key, n_classes):
    """Deterministic synthetic parameters matching the PyTorch module shapes."""
    k1, k2, k3, k4, k5, k6, k7 = jax.random.split(key, 7)
    f32 = jnp.float32

    # Linear(512 -> 1024, bias=False): stored as (in, out) for x @ W
    w1 = jax.random.normal(k1, (512, 1024), f32) * 0.02
    # BatchNorm1d(1024) — randomize running stats so BN actually does work
    bn_gamma = 1.0 + 0.1 * jax.random.normal(k2, (1, 1024), f32)
    bn_beta = 0.1 * jax.random.normal(k3, (1, 1024), f32)
    bn_mean = 0.05 * jax.random.normal(k4, (1, 1024), f32)
    bn_var = jnp.abs(1.0 + 0.1 * jax.random.normal(k5, (1, 1024), f32))
    # Linear(1024 -> C, bias=True)
    w2 = jax.random.normal(k6, (1024, n_classes), f32) * 0.02
    b2 = jnp.linspace(-0.1, 0.1, n_classes, dtype=f32).reshape(1, n_classes)
    # Linear(512 -> C, bias=True)
    w3 = jax.random.normal(k7, (512, n_classes), f32) * 0.02
    b3 = jnp.linspace(0.1, -0.1, n_classes, dtype=f32).reshape(1, n_classes)

    return dict(
        w1=w1, bn_gamma=bn_gamma, bn_beta=bn_beta, bn_mean=bn_mean, bn_var=bn_var,
        w2=w2, b2=b2, w3=w3, b3=b3,
    )


def reference_forward(ftr_1, params):
    """Pure-JAX f32 reference of the PyTorch eval-mode forward."""
    x = ftr_1.reshape(ftr_1.shape[0], -1).astype(jnp.float32)
    h = x @ params["w1"]
    h = (h - params["bn_mean"]) / jnp.sqrt(params["bn_var"] + BN_EPS)
    h = h * params["bn_gamma"] + params["bn_beta"]
    h = jnp.maximum(h, 0.0)
    lgt_mlp = h @ params["w2"] + params["b2"]
    lgt_lin = x @ params["w3"] + params["b3"]
    return lgt_mlp, lgt_lin


if __name__ == "__main__":
    key = jax.random.PRNGKey(0)
    k_x, k_p = jax.random.split(key)

    n_classes = 10
    B = 4
    # "features at 1x1 layer": NCHW with spatial 1x1 and 512 channels
    ftr_1 = jax.random.normal(k_x, (B, 512, 1, 1), jnp.float32)
    params = init_params(k_p, n_classes)

    # One-time packing (BN fold, head fusion, padding, bf16 cast) — cached.
    packed = prepare_params(params)

    lgt_mlp, lgt_lin = evaluator_forward(ftr_1, packed, n_classes)
    jax.block_until_ready((lgt_mlp, lgt_lin))

    ref_mlp, ref_lin = reference_forward(ftr_1, params)
    assert lgt_mlp.shape == (B, n_classes) and lgt_lin.shape == (B, n_classes)
    # bf16 weights/activations/outputs with f32 MXU accumulation: ~0.5% rel error.
    assert jnp.allclose(lgt_mlp, ref_mlp, atol=5e-2, rtol=5e-2)
    assert jnp.allclose(lgt_lin, ref_lin, atol=5e-2, rtol=5e-2)

    print("KERNEL_OK")
</pallas_src>

<mosaic_0001>
module attributes {stable_mosaic.version = 11 : i64} {
  func.func @evaluator_kernel(%arg0: i32, %arg1: memref<16x512xf32, #tpu.memory_space<vmem>>, %arg2: memref<512x1152xbf16, #tpu.memory_space<vmem>>, %arg3: memref<1x1024xf32, #tpu.memory_space<vmem>>, %arg4: memref<1024x128xbf16, #tpu.memory_space<vmem>>, %arg5: memref<1x128xf32, #tpu.memory_space<vmem>>, %arg6: memref<1x128xf32, #tpu.memory_space<vmem>>, %arg7: memref<16x128xbf16, #tpu.memory_space<vmem>>, %arg8: memref<16x128xbf16, #tpu.memory_space<vmem>>) attributes {dimension_semantics = [#tpu.dimension_semantics<parallel>], iteration_bounds = array<i64: 1>, scalar_prefetch = 0 : i64, scratch_operands = 0 : i64, tpu.core_type = #tpu.core_type<tc>, window_params = [{transform_indices = @transform_0, window_bounds = array<i64: 16, 512>}, {pipeline_mode = #tpu.pipeline_mode<synchronous>, transform_indices = @transform_1, window_bounds = array<i64: 512, 1152>}, {pipeline_mode = #tpu.pipeline_mode<synchronous>, transform_indices = @transform_2, window_bounds = array<i64: 1, 1024>}, {pipeline_mode = #tpu.pipeline_mode<synchronous>, transform_indices = @transform_3, window_bounds = array<i64: 1024, 128>}, {pipeline_mode = #tpu.pipeline_mode<synchronous>, transform_indices = @transform_4, window_bounds = array<i64: 1, 128>}, {pipeline_mode = #tpu.pipeline_mode<synchronous>, transform_indices = @transform_5, window_bounds = array<i64: 1, 128>}, {transform_indices = @transform_6, window_bounds = array<i64: 16, 128>}, {transform_indices = @transform_7, window_bounds = array<i64: 16, 128>}]} {
    %c0 = arith.constant 0 : index
    %c0_0 = arith.constant 0 : index
    %0 = vector.load %arg1[%c0, %c0_0] : memref<16x512xf32, #tpu.memory_space<vmem>>, vector<16x512xf32>
    %1 = arith.truncf %0 : vector<16x512xf32> to vector<16x512xbf16>
    %c0_1 = arith.constant 0 : index
    %c0_2 = arith.constant 0 : index
    %2 = vector.load %arg2[%c0_1, %c0_2] : memref<512x1152xbf16, #tpu.memory_space<vmem>>, vector<512x1152xbf16>
    %cst = arith.constant dense<0.000000e+00> : vector<16x1152xf32>
    %3 = tpu.matmul %1, %2, %cst {dimension_numbers = #tpu.dot_dimension_numbers<[1], [0], [0], [1], [0, 0, 1, 1], [], []>} : vector<16x512xbf16>, vector<512x1152xbf16>, vector<16x1152xf32> -> vector<16x1152xf32>
    %4 = vector.extract_strided_slice %3 {offsets = [0, 0], sizes = [16, 1024], strides = [1, 1]} : vector<16x1152xf32> to vector<16x1024xf32>
    %c0_3 = arith.constant 0 : index
    %c0_4 = arith.constant 0 : index
    %5 = vector.load %arg3[%c0_3, %c0_4] : memref<1x1024xf32, #tpu.memory_space<vmem>>, vector<1x1024xf32>
    %6 = vector.broadcast %5 : vector<1x1024xf32> to vector<16x1024xf32>
    %7 = arith.addf %4, %6 : vector<16x1024xf32>
    %cst_5 = arith.constant 0.000000e+00 : f32
    %8 = vector.broadcast %cst_5 : f32 to vector<16x1024xf32>
    %9 = arith.maximumf %7, %8 : vector<16x1024xf32>
    %10 = arith.truncf %9 : vector<16x1024xf32> to vector<16x1024xbf16>
    %c0_6 = arith.constant 0 : index
    %c0_7 = arith.constant 0 : index
    %11 = vector.load %arg4[%c0_6, %c0_7] : memref<1024x128xbf16, #tpu.memory_space<vmem>>, vector<1024x128xbf16>
    %cst_8 = arith.constant dense<0.000000e+00> : vector<16x128xf32>
    %12 = tpu.matmul %10, %11, %cst_8 {dimension_numbers = #tpu.dot_dimension_numbers<[1], [0], [0], [1], [0, 0, 1, 1], [], []>} : vector<16x1024xbf16>, vector<1024x128xbf16>, vector<16x128xf32> -> vector<16x128xf32>
    %c0_9 = arith.constant 0 : index
    %c0_10 = arith.constant 0 : index
    %13 = vector.load %arg5[%c0_9, %c0_10] : memref<1x128xf32, #tpu.memory_space<vmem>>, vector<1x128xf32>
    %14 = vector.broadcast %13 : vector<1x128xf32> to vector<16x128xf32>
    %15 = arith.addf %12, %14 : vector<16x128xf32>
    %16 = arith.truncf %15 : vector<16x128xf32> to vector<16x128xbf16>
    %c0_11 = arith.constant 0 : index
    %c0_12 = arith.constant 0 : index
    %17 = vector.load %arg7[%c0_11, %c0_12] : memref<16x128xbf16, #tpu.memory_space<vmem>>, vector<16x128xbf16>
    tpu.vector_store %arg7[%c0_11, %c0_12], %16 {strides = array<i32>} : memref<16x128xbf16, #tpu.memory_space<vmem>>, vector<16x128xbf16>,
    %18 = vector.extract_strided_slice %3 {offsets = [0, 1024], sizes = [16, 128], strides = [1, 1]} : vector<16x1152xf32> to vector<16x128xf32>
    %c0_13 = arith.constant 0 : index
    %c0_14 = arith.constant 0 : index
    %19 = vector.load %arg6[%c0_13, %c0_14] : memref<1x128xf32, #tpu.memory_space<vmem>>, vector<1x128xf32>
    %20 = vector.broadcast %19 : vector<1x128xf32> to vector<16x128xf32>
    %21 = arith.addf %18, %20 : vector<16x128xf32>
    %22 = arith.truncf %21 : vector<16x128xf32> to vector<16x128xbf16>
    %c0_15 = arith.constant 0 : index
    %c0_16 = arith.constant 0 : index
    %23 = vector.load %arg8[%c0_15, %c0_16] : memref<16x128xbf16, #tpu.memory_space<vmem>>, vector<16x128xbf16>
    tpu.vector_store %arg8[%c0_15, %c0_16], %22 {strides = array<i32>} : memref<16x128xbf16, #tpu.memory_space<vmem>>, vector<16x128xbf16>,
    return
  }
  func.func @transform_0(%arg0: i32) -> (i32, i32) {
    %c0_i32 = arith.constant 0 : i32
    %c0_i32_0 = arith.constant 0 : i32
    return %arg0, %c0_i32 : i32, i32
  }
  func.func @transform_1(%arg0: i32) -> (i32, i32) {
    %c0_i32 = arith.constant 0 : i32
    %c0_i32_0 = arith.constant 0 : i32
    %c0_i32_1 = arith.constant 0 : i32
    return %c0_i32, %c0_i32_0 : i32, i32
  }
  func.func @transform_2(%arg0: i32) -> (i32, i32) {
    %c0_i32 = arith.constant 0 : i32
    %c0_i32_0 = arith.constant 0 : i32
    %c0_i32_1 = arith.constant 0 : i32
    return %c0_i32, %c0_i32_0 : i32, i32
  }
  func.func @transform_3(%arg0: i32) -> (i32, i32) {
    %c0_i32 = arith.constant 0 : i32
    %c0_i32_0 = arith.constant 0 : i32
    %c0_i32_1 = arith.constant 0 : i32
    return %c0_i32, %c0_i32_0 : i32, i32
  }
  func.func @transform_4(%arg0: i32) -> (i32, i32) {
    %c0_i32 = arith.constant 0 : i32
    %c0_i32_0 = arith.constant 0 : i32
    %c0_i32_1 = arith.constant 0 : i32
    return %c0_i32, %c0_i32_0 : i32, i32
  }
  func.func @transform_5(%arg0: i32) -> (i32, i32) {
    %c0_i32 = arith.constant 0 : i32
    %c0_i32_0 = arith.constant 0 : i32
    %c0_i32_1 = arith.constant 0 : i32
    return %c0_i32, %c0_i32_0 : i32, i32
  }
  func.func @transform_6(%arg0: i32) -> (i32, i32) {
    %c0_i32 = arith.constant 0 : i32
    %c0_i32_0 = arith.constant 0 : i32
    return %arg0, %c0_i32 : i32, i32
  }
  func.func @transform_7(%arg0: i32) -> (i32, i32) {
    %c0_i32 = arith.constant 0 : i32
    %c0_i32_0 = arith.constant 0 : i32
    return %arg0, %c0_i32 : i32, i32
  }
}

</mosaic_0001>

<llo_original>
// kernel: evaluator_forward.1
$region0: #{evaluator_forward.1}
  #allocation0 [shape = 'u32[]', space=smem, size = 0x4, offset = 0x4, fixed_abs, tag = 'smem constant byte address 0x4 - core index']
  #allocation1 [shape = 'u32[144,128]{1,0:T(1,128)}', space=vmem, size = 0x12000, scoped, tag = 'internal scratch']
  %s0 = inlined_call_operand.vmem [shape: f32[16,512], index: 0, kind: input, shape index: {}]
  %s1 = inlined_call_operand.hbm [shape: bf16[512,1152], index: 1, kind: input, shape index: {}]
  %s2 = inlined_call_operand.hbm [shape: f32[1,1024], index: 2, kind: input, shape index: {}]
  %s3 = inlined_call_operand.hbm [shape: bf16[1024,128], index: 3, kind: input, shape index: {}]
  %s4 = inlined_call_operand.hbm [shape: f32[1,128], index: 4, kind: input, shape index: {}]
  %s5 = inlined_call_operand.hbm [shape: f32[1,128], index: 5, kind: input, shape index: {}]
  %s6 = inlined_call_operand.vmem [shape: bf16[16,128], index: 6, kind: output, shape index: {0}]
  %s7 = inlined_call_operand.vmem [shape: bf16[16,128], index: 7, kind: output, shape index: {1}]
  %8 = xla_tuple %s6, %s7
  %s9 = sld [smem:[#allocation0]]
  $region62: #{evaluator_forward.1} parent=0
    _
  %s11 = ssub.s32 1, %s9
  %s12 = scalar_select 0, %s11, %s9
  $region1: #{evaluator_forward.1} parent=0
    #allocation2 [shape = 'u8[1179648]{0}', space=vmem, size = 0x120000, scoped, tag = 'input window, operand 1, single buffered']
    #allocation3 [shape = 's32[1]{0}', space=sflag, size = 0x4, scoped, tag = 'scoped memory for evaluator_forward.1']
    #allocation4 [shape = 'u8[4096]{0}', space=vmem, size = 0x1000, scoped, tag = 'input window, operand 2, single buffered']
    #allocation5 [shape = 's32[1]{0}', space=sflag, size = 0x4, scoped, tag = 'scoped memory for evaluator_forward.1']
    #allocation6 [shape = 'u8[262144]{0}', space=vmem, size = 0x40000, scoped, tag = 'input window, operand 3, single buffered']
    #allocation7 [shape = 'u8[512]{0}', space=vmem, size = 0x400, scoped, tag = 'input window, operand 4, single buffered']
    #allocation8 [shape = 's32[1]{0}', space=sflag, size = 0x4, scoped, tag = 'scoped memory for evaluator_forward.1']
    #allocation9 [shape = 'u8[512]{0}', space=vmem, size = 0x400, scoped, tag = 'input window, operand 5, single buffered']
    %13 = vsyncpa [#allocation3], 0
    %14 = vsyncpa [#allocation5], 0
    %15 = vsyncpa [#allocation8], 0
    // Predicated region
    $region2: #{evaluator_forward.1} parent=1 // pred_check
      _
    $region3: #{evaluator_forward.1} parent=1 // pred_check_branch
      %17 = sbr.rel (0) target = $region5
    $region4: #{evaluator_forward.1} parent=1 // pred_region
      _
    $region5: #{evaluator_forward.1} parent=1 // pred_fallthru
      _
    // Predicated region
    $region6: #{evaluator_forward.1} parent=1 // pred_check
      _
    $region7: #{evaluator_forward.1} parent=1 // pred_check_branch
      %19 = sbr.rel (0) target = $region9
    $region8: #{evaluator_forward.1} parent=1 // pred_region
      %s21 = ssub.s32 36864, 36864
      %22 = vsyncadd [#allocation3], %s21
      %s23 = sshll.u32 [#allocation2], 4
      %s24 = int_to_ptr.vmem [resolvable:$true] %s23
      %29 = dma.hbm_to_vmem [thread:$0]  %s1, 36864, %s24, [#allocation3], 576, 576, 36
    $region9: #{evaluator_forward.1} parent=1 // pred_fallthru
      _
    // Predicated region
    $region10: #{evaluator_forward.1} parent=1 // pred_check
      _
    $region11: #{evaluator_forward.1} parent=1 // pred_check_branch
      %31 = sbr.rel (0) target = $region13
    $region12: #{evaluator_forward.1} parent=1 // pred_region
      %s33 = ssub.s32 128, 128
      %34 = vsyncadd [#allocation5], %s33
      %s36 = sshll.u32 [#allocation4], 4
      %s37 = int_to_ptr.vmem [resolvable:$true] %s36
      %39 = dma.hbm_to_vmem [thread:$0]  %s2, 128, %s37, [#allocation5]
    $region13: #{evaluator_forward.1} parent=1 // pred_fallthru
      _
    // Predicated region
    $region14: #{evaluator_forward.1} parent=1 // pred_check
      _
    $region15: #{evaluator_forward.1} parent=1 // pred_check_branch
      %41 = sbr.rel (0) target = $region17
    $region16: #{evaluator_forward.1} parent=1 // pred_region
      %s43 = ssub.s32 8192, 8192
      %44 = vsyncadd [#allocation5], %s43
      %s45 = sshll.u32 [#allocation6], 4
      %s46 = int_to_ptr.vmem [resolvable:$true] %s45
      %51 = dma.hbm_to_vmem [thread:$0]  %s3, 8192, %s46, [#allocation5], 64, 64, 4
    $region17: #{evaluator_forward.1} parent=1 // pred_fallthru
      _
    // Predicated region
    $region18: #{evaluator_forward.1} parent=1 // pred_check
      _
    $region19: #{evaluator_forward.1} parent=1 // pred_check_branch
      %53 = sbr.rel (0) target = $region21
    $region20: #{evaluator_forward.1} parent=1 // pred_region
      %s55 = ssub.s32 16, 16
      %56 = vsyncadd [#allocation8], %s55
      %s58 = sshll.u32 [#allocation7], 4
      %s59 = int_to_ptr.vmem [resolvable:$true] %s58
      %61 = dma.hbm_to_vmem [thread:$0]  %s4, 16, %s59, [#allocation8]
    $region21: #{evaluator_forward.1} parent=1 // pred_fallthru
      _
    // Predicated region
    $region22: #{evaluator_forward.1} parent=1 // pred_check
      _
    $region23: #{evaluator_forward.1} parent=1 // pred_check_branch
      %63 = sbr.rel (0) target = $region25
    $region24: #{evaluator_forward.1} parent=1 // pred_region
      %s65 = ssub.s32 16, 16
      %66 = vsyncadd [#allocation8], %s65
      %s68 = sshll.u32 [#allocation9], 4
      %s69 = int_to_ptr.vmem [resolvable:$true] %s68
      %71 = dma.hbm_to_vmem [thread:$0]  %s5, 16, %s69, [#allocation8]
    $region25: #{evaluator_forward.1} parent=1 // pred_fallthru
      _
    // Predicated region
    $region26: #{evaluator_forward.1} parent=1 // pred_check
      _
    $region27: #{evaluator_forward.1} parent=1 // pred_check_branch
      %73 = sbr.rel (0) target = $region29
    $region28: #{evaluator_forward.1} parent=1 // pred_region
      %74 = dma.done [#allocation3], 36864
    $region29: #{evaluator_forward.1} parent=1 // pred_fallthru
      _
    // Predicated region
    $region30: #{evaluator_forward.1} parent=1 // pred_check
      _
    $region31: #{evaluator_forward.1} parent=1 // pred_check_branch
      %76 = sbr.rel (0) target = $region33
    $region32: #{evaluator_forward.1} parent=1 // pred_region
      %77 = dma.done [#allocation5], 128
    $region33: #{evaluator_forward.1} parent=1 // pred_fallthru
      _
    // Predicated region
    $region34: #{evaluator_forward.1} parent=1 // pred_check
      _
    $region35: #{evaluator_forward.1} parent=1 // pred_check_branch
      %79 = sbr.rel (0) target = $region37
    $region36: #{evaluator_forward.1} parent=1 // pred_region
      %80 = dma.done [#allocation5], 8192
    $region37: #{evaluator_forward.1} parent=1 // pred_fallthru
      _
    // Predicated region
    $region38: #{evaluator_forward.1} parent=1 // pred_check
      _
    $region39: #{evaluator_forward.1} parent=1 // pred_check_branch
      %82 = sbr.rel (0) target = $region41
    $region40: #{evaluator_forward.1} parent=1 // pred_region
      %83 = dma.done [#allocation8], 16
    $region41: #{evaluator_forward.1} parent=1 // pred_fallthru
      _
    // Predicated region
    $region42: #{evaluator_forward.1} parent=1 // pred_check
      _
    $region43: #{evaluator_forward.1} parent=1 // pred_check_branch
      %85 = sbr.rel (0) target = $region45
    $region44: #{evaluator_forward.1} parent=1 // pred_region
      %86 = dma.done [#allocation8], 16
    $region45: #{evaluator_forward.1} parent=1 // pred_fallthru
      _
    %v88 = vld [vmem:[%s0] sm:$0xff]
    %v89 = vld [vmem:[%s0 + $0x8] sm:$0xff]
    %v90 = vld [vmem:[%s0 + $0x10] sm:$0xff]
    %v91 = vld [vmem:[%s0 + $0x18] sm:$0xff]
    %v92 = vld [vmem:[%s0 + $0x20] sm:$0xff]
    %v93 = vld [vmem:[%s0 + $0x28] sm:$0xff]
    %v94 = vld [vmem:[%s0 + $0x30] sm:$0xff]
    %v95 = vld [vmem:[%s0 + $0x38] sm:$0xff]
    %v96 = vpack.c.bf16 %v92, %v88
    %v97 = vpack.c.bf16 %v93, %v89
    %v98 = vpack.c.bf16 %v94, %v90
    %v99 = vpack.c.bf16 %v95, %v91
    %v100 = vld [vmem:[#allocation2] sm:$0xff]
    %v101 = vld [vmem:[#allocation2 + $0x8] sm:$0xff]
    %v102 = vld [vmem:[#allocation2 + $0x10] sm:$0xff]
    %v103 = vld [vmem:[#allocation2 + $0x18] sm:$0xff]
    %v104 = vld [vmem:[#allocation2 + $0x20] sm:$0xf]
    %v105 = vld [vmem:[#allocation2 + $0x24] sm:$0xff]
    %v106 = vld [vmem:[#allocation2 + $0x2c] sm:$0xff]
    %v107 = vld [vmem:[#allocation2 + $0x34] sm:$0xff]
    %v108 = vld [vmem:[#allocation2 + $0x3c] sm:$0xff]
    %v109 = vld [vmem:[#allocation2 + $0x44] sm:$0xf]
    %v110 = vld [vmem:[#allocation2 + $0x48] sm:$0xff]
    %v111 = vld [vmem:[#allocation2 + $0x50] sm:$0xff]
    %v112 = vld [vmem:[#allocation2 + $0x58] sm:$0xff]
    %v113 = vld [vmem:[#allocation2 + $0x60] sm:$0xff]
    %v114 = vld [vmem:[#allocation2 + $0x68] sm:$0xf]
    %v115 = vld [vmem:[#allocation2 + $0x6c] sm:$0xff]
    %v116 = vld [vmem:[#allocation2 + $0x74] sm:$0xff]
    %v117 = vld [vmem:[#allocation2 + $0x7c] sm:$0xff]
    %v118 = vld [vmem:[#allocation2 + $0x84] sm:$0xff]
    %v119 = vld [vmem:[#allocation2 + $0x8c] sm:$0xf]
    %v120 = vld [vmem:[#allocation2 + $0x90] sm:$0xff]
    %v121 = vld [vmem:[#allocation2 + $0x98] sm:$0xff]
    %v122 = vld [vmem:[#allocation2 + $0xa0] sm:$0xff]
    %v123 = vld [vmem:[#allocation2 + $0xa8] sm:$0xff]
    %v124 = vld [vmem:[#allocation2 + $0xb0] sm:$0xf]
    %v125 = vld [vmem:[#allocation2 + $0xb4] sm:$0xff]
    %v126 = vld [vmem:[#allocation2 + $0xbc] sm:$0xff]
    %v127 = vld [vmem:[#allocation2 + $0xc4] sm:$0xff]
    %v128 = vld [vmem:[#allocation2 + $0xcc] sm:$0xff]
    %v129 = vld [vmem:[#allocation2 + $0xd4] sm:$0xf]
    %v130 = vld [vmem:[#allocation2 + $0xd8] sm:$0xff]
    %v131 = vld [vmem:[#allocation2 + $0xe0] sm:$0xff]
    %v132 = vld [vmem:[#allocation2 + $0xe8] sm:$0xff]
    %v133 = vld [vmem:[#allocation2 + $0xf0] sm:$0xff]
    %v134 = vld [vmem:[#allocation2 + $0xf8] sm:$0xf]
    %v135 = vld [vmem:[#allocation2 + $0xfc] sm:$0xff]
    %v136 = vld [vmem:[#allocation2 + $0x104] sm:$0xff]
    %v137 = vld [vmem:[#allocation2 + $0x10c] sm:$0xff]
    %v138 = vld [vmem:[#allocation2 + $0x114] sm:$0xff]
    %v139 = vld [vmem:[#allocation2 + $0x11c] sm:$0xf]
    %v140 = vld [vmem:[#allocation2 + $0x120] sm:$0xff]
    %v141 = vld [vmem:[#allocation2 + $0x128] sm:$0xff]
    %v142 = vld [vmem:[#allocation2 + $0x130] sm:$0xff]
    %v143 = vld [vmem:[#allocation2 + $0x138] sm:$0xff]
    %v144 = vld [vmem:[#allocation2 + $0x140] sm:$0xf]
    %v145 = vld [vmem:[#allocation2 + $0x144] sm:$0xff]
    %v146 = vld [vmem:[#allocation2 + $0x14c] sm:$0xff]
    %v147 = vld [vmem:[#allocation2 + $0x154] sm:$0xff]
    %v148 = vld [vmem:[#allocation2 + $0x15c] sm:$0xff]
    %v149 = vld [vmem:[#allocation2 + $0x164] sm:$0xf]
    %v150 = vld [vmem:[#allocation2 + $0x168] sm:$0xff]
    %v151 = vld [vmem:[#allocation2 + $0x170] sm:$0xff]
    %v152 = vld [vmem:[#allocation2 + $0x178] sm:$0xff]
    %v153 = vld [vmem:[#allocation2 + $0x180] sm:$0xff]
    %v154 = vld [vmem:[#allocation2 + $0x188] sm:$0xf]
    %v155 = vld [vmem:[#allocation2 + $0x18c] sm:$0xff]
    %v156 = vld [vmem:[#allocation2 + $0x194] sm:$0xff]
    %v157 = vld [vmem:[#allocation2 + $0x19c] sm:$0xff]
    %v158 = vld [vmem:[#allocation2 + $0x1a4] sm:$0xff]
    %v159 = vld [vmem:[#allocation2 + $0x1ac] sm:$0xf]
    %v160 = vld [vmem:[#allocation2 + $0x1b0] sm:$0xff]
    %v161 = vld [vmem:[#allocation2 + $0x1b8] sm:$0xff]
    %v162 = vld [vmem:[#allocation2 + $0x1c0] sm:$0xff]
    %v163 = vld [vmem:[#allocation2 + $0x1c8] sm:$0xff]
    %v164 = vld [vmem:[#allocation2 + $0x1d0] sm:$0xf]
    %v165 = vld [vmem:[#allocation2 + $0x1d4] sm:$0xff]
    %v166 = vld [vmem:[#allocation2 + $0x1dc] sm:$0xff]
    %v167 = vld [vmem:[#allocation2 + $0x1e4] sm:$0xff]
    %v168 = vld [vmem:[#allocation2 + $0x1ec] sm:$0xff]
    %v169 = vld [vmem:[#allocation2 + $0x1f4] sm:$0xf]
    %v170 = vld [vmem:[#allocation2 + $0x1f8] sm:$0xff]
    %v171 = vld [vmem:[#allocation2 + $0x200] sm:$0xff]
    %v172 = vld [vmem:[#allocation2 + $0x208] sm:$0xff]
    %v173 = vld [vmem:[#allocation2 + $0x210] sm:$0xff]
    %v174 = vld [vmem:[#allocation2 + $0x218] sm:$0xf]
    %v175 = vld [vmem:[#allocation2 + $0x21c] sm:$0xff]
    %v176 = vld [vmem:[#allocation2 + $0x224] sm:$0xff]
    %v177 = vld [vmem:[#allocation2 + $0x22c] sm:$0xff]
    %v178 = vld [vmem:[#allocation2 + $0x234] sm:$0xff]
    %v179 = vld [vmem:[#allocation2 + $0x23c] sm:$0xf]
    %v180 = vld [vmem:[#allocation2 + $0x240] sm:$0xff]
    %v181 = vld [vmem:[#allocation2 + $0x248] sm:$0xff]
    %v182 = vld [vmem:[#allocation2 + $0x250] sm:$0xff]
    %v183 = vld [vmem:[#allocation2 + $0x258] sm:$0xff]
    %v184 = vld [vmem:[#allocation2 + $0x260] sm:$0xf]
    %v185 = vld [vmem:[#allocation2 + $0x264] sm:$0xff]
    %v186 = vld [vmem:[#allocation2 + $0x26c] sm:$0xff]
    %v187 = vld [vmem:[#allocation2 + $0x274] sm:$0xff]
    %v188 = vld [vmem:[#allocation2 + $0x27c] sm:$0xff]
    %v189 = vld [vmem:[#allocation2 + $0x284] sm:$0xf]
    %v190 = vld [vmem:[#allocation2 + $0x288] sm:$0xff]
    %v191 = vld [vmem:[#allocation2 + $0x290] sm:$0xff]
    %v192 = vld [vmem:[#allocation2 + $0x298] sm:$0xff]
    %v193 = vld [vmem:[#allocation2 + $0x2a0] sm:$0xff]
    %v194 = vld [vmem:[#allocation2 + $0x2a8] sm:$0xf]
    %v195 = vld [vmem:[#allocation2 + $0x2ac] sm:$0xff]
    %v196 = vld [vmem:[#allocation2 + $0x2b4] sm:$0xff]
    %v197 = vld [vmem:[#allocation2 + $0x2bc] sm:$0xff]
    %v198 = vld [vmem:[#allocation2 + $0x2c4] sm:$0xff]
    %v199 = vld [vmem:[#allocation2 + $0x2cc] sm:$0xf]
    %v200 = vld [vmem:[#allocation2 + $0x2d0] sm:$0xff]
    %v201 = vld [vmem:[#allocation2 + $0x2d8] sm:$0xff]
    %v202 = vld [vmem:[#allocation2 + $0x2e0] sm:$0xff]
    %v203 = vld [vmem:[#allocation2 + $0x2e8] sm:$0xff]
    %v204 = vld [vmem:[#allocation2 + $0x2f0] sm:$0xf]
    %v205 = vld [vmem:[#allocation2 + $0x2f4] sm:$0xff]
    %v206 = vld [vmem:[#allocation2 + $0x2fc] sm:$0xff]
    %v207 = vld [vmem:[#allocation2 + $0x304] sm:$0xff]
    %v208 = vld [vmem:[#allocation2 + $0x30c] sm:$0xff]
    %v209 = vld [vmem:[#allocation2 + $0x314] sm:$0xf]
    %v210 = vld [vmem:[#allocation2 + $0x318] sm:$0xff]
    %v211 = vld [vmem:[#allocation2 + $0x320] sm:$0xff]
    %v212 = vld [vmem:[#allocation2 + $0x328] sm:$0xff]
    %v213 = vld [vmem:[#allocation2 + $0x330] sm:$0xff]
    %v214 = vld [vmem:[#allocation2 + $0x338] sm:$0xf]
    %v215 = vld [vmem:[#allocation2 + $0x33c] sm:$0xff]
    %v216 = vld [vmem:[#allocation2 + $0x344] sm:$0xff]
    %v217 = vld [vmem:[#allocation2 + $0x34c] sm:$0xff]
    %v218 = vld [vmem:[#allocation2 + $0x354] sm:$0xff]
    %v219 = vld [vmem:[#allocation2 + $0x35c] sm:$0xf]
    %v220 = vld [vmem:[#allocation2 + $0x360] sm:$0xff]
    %v221 = vld [vmem:[#allocation2 + $0x368] sm:$0xff]
    %v222 = vld [vmem:[#allocation2 + $0x370] sm:$0xff]
    %v223 = vld [vmem:[#allocation2 + $0x378] sm:$0xff]
    %v224 = vld [vmem:[#allocation2 + $0x380] sm:$0xf]
    %v225 = vld [vmem:[#allocation2 + $0x384] sm:$0xff]
    %v226 = vld [vmem:[#allocation2 + $0x38c] sm:$0xff]
    %v227 = vld [vmem:[#allocation2 + $0x394] sm:$0xff]
    %v228 = vld [vmem:[#allocation2 + $0x39c] sm:$0xff]
    %v229 = vld [vmem:[#allocation2 + $0x3a4] sm:$0xf]
    %v230 = vld [vmem:[#allocation2 + $0x3a8] sm:$0xff]
    %v231 = vld [vmem:[#allocation2 + $0x3b0] sm:$0xff]
    %v232 = vld [vmem:[#allocation2 + $0x3b8] sm:$0xff]
    %v233 = vld [vmem:[#allocation2 + $0x3c0] sm:$0xff]
    %v234 = vld [vmem:[#allocation2 + $0x3c8] sm:$0xf]
    %v235 = vld [vmem:[#allocation2 + $0x3cc] sm:$0xff]
    %v236 = vld [vmem:[#allocation2 + $0x3d4] sm:$0xff]
    %v237 = vld [vmem:[#allocation2 + $0x3dc] sm:$0xff]
    %v238 = vld [vmem:[#allocation2 + $0x3e4] sm:$0xff]
    %v239 = vld [vmem:[#allocation2 + $0x3ec] sm:$0xf]
    %v240 = vld [vmem:[#allocation2 + $0x3f0] sm:$0xff]
    %v241 = vld [vmem:[#allocation2 + $0x3f8] sm:$0xff]
    %v242 = vld [vmem:[#allocation2 + $0x400] sm:$0xff]
    %v243 = vld [vmem:[#allocation2 + $0x408] sm:$0xff]
    %v244 = vld [vmem:[#allocation2 + $0x410] sm:$0xf]
    %v245 = vld [vmem:[#allocation2 + $0x414] sm:$0xff]
    %v246 = vld [vmem:[#allocation2 + $0x41c] sm:$0xff]
    %v247 = vld [vmem:[#allocation2 + $0x424] sm:$0xff]
    %v248 = vld [vmem:[#allocation2 + $0x42c] sm:$0xff]
    %v249 = vld [vmem:[#allocation2 + $0x434] sm:$0xf]
    %v250 = vld [vmem:[#allocation2 + $0x438] sm:$0xff]
    %v251 = vld [vmem:[#allocation2 + $0x440] sm:$0xff]
    %v252 = vld [vmem:[#allocation2 + $0x448] sm:$0xff]
    %v253 = vld [vmem:[#allocation2 + $0x450] sm:$0xff]
    %v254 = vld [vmem:[#allocation2 + $0x458] sm:$0xf]
    %v255 = vld [vmem:[#allocation2 + $0x45c] sm:$0xff]
    %v256 = vld [vmem:[#allocation2 + $0x464] sm:$0xff]
    %v257 = vld [vmem:[#allocation2 + $0x46c] sm:$0xff]
    %v258 = vld [vmem:[#allocation2 + $0x474] sm:$0xff]
    %v259 = vld [vmem:[#allocation2 + $0x47c] sm:$0xf]
    %v260 = vld [vmem:[#allocation2 + $0x480] sm:$0xff]
    %v261 = vld [vmem:[#allocation2 + $0x488] sm:$0xff]
    %v262 = vld [vmem:[#allocation2 + $0x490] sm:$0xff]
    %v263 = vld [vmem:[#allocation2 + $0x498] sm:$0xff]
    %v264 = vld [vmem:[#allocation2 + $0x4a0] sm:$0xf]
    %v265 = vld [vmem:[#allocation2 + $0x4a4] sm:$0xff]
    %v266 = vld [vmem:[#allocation2 + $0x4ac] sm:$0xff]
    %v267 = vld [vmem:[#allocation2 + $0x4b4] sm:$0xff]
    %v268 = vld [vmem:[#allocation2 + $0x4bc] sm:$0xff]
    %v269 = vld [vmem:[#allocation2 + $0x4c4] sm:$0xf]
    %v270 = vld [vmem:[#allocation2 + $0x4c8] sm:$0xff]
    %v271 = vld [vmem:[#allocation2 + $0x4d0] sm:$0xff]
    %v272 = vld [vmem:[#allocation2 + $0x4d8] sm:$0xff]
    %v273 = vld [vmem:[#allocation2 + $0x4e0] sm:$0xff]
    %v274 = vld [vmem:[#allocation2 + $0x4e8] sm:$0xf]
    %v275 = vld [vmem:[#allocation2 + $0x4ec] sm:$0xff]
    %v276 = vld [vmem:[#allocation2 + $0x4f4] sm:$0xff]
    %v277 = vld [vmem:[#allocation2 + $0x4fc] sm:$0xff]
    %v278 = vld [vmem:[#allocation2 + $0x504] sm:$0xff]
    %v279 = vld [vmem:[#allocation2 + $0x50c] sm:$0xf]
    %v280 = vld [vmem:[#allocation2 + $0x510] sm:$0xff]
    %v281 = vld [vmem:[#allocation2 + $0x518] sm:$0xff]
    %v282 = vld [vmem:[#allocation2 + $0x520] sm:$0xff]
    %v283 = vld [vmem:[#allocation2 + $0x528] sm:$0xff]
    %v284 = vld [vmem:[#allocation2 + $0x530] sm:$0xf]
    %v285 = vld [vmem:[#allocation2 + $0x534] sm:$0xff]
    %v286 = vld [vmem:[#allocation2 + $0x53c] sm:$0xff]
    %v287 = vld [vmem:[#allocation2 + $0x544] sm:$0xff]
    %v288 = vld [vmem:[#allocation2 + $0x54c] sm:$0xff]
    %v289 = vld [vmem:[#allocation2 + $0x554] sm:$0xf]
    %v290 = vld [vmem:[#allocation2 + $0x558] sm:$0xff]
    %v291 = vld [vmem:[#allocation2 + $0x560] sm:$0xff]
    %v292 = vld [vmem:[#allocation2 + $0x568] sm:$0xff]
    %v293 = vld [vmem:[#allocation2 + $0x570] sm:$0xff]
    %v294 = vld [vmem:[#allocation2 + $0x578] sm:$0xf]
    %v295 = vld [vmem:[#allocation2 + $0x57c] sm:$0xff]
    %v296 = vld [vmem:[#allocation2 + $0x584] sm:$0xff]
    %v297 = vld [vmem:[#allocation2 + $0x58c] sm:$0xff]
    %v298 = vld [vmem:[#allocation2 + $0x594] sm:$0xff]
    %v299 = vld [vmem:[#allocation2 + $0x59c] sm:$0xf]
    %v300 = vld [vmem:[#allocation2 + $0x5a0] sm:$0xff]
    %v301 = vld [vmem:[#allocation2 + $0x5a8] sm:$0xff]
    %v302 = vld [vmem:[#allocation2 + $0x5b0] sm:$0xff]
    %v303 = vld [vmem:[#allocation2 + $0x5b8] sm:$0xff]
    %v304 = vld [vmem:[#allocation2 + $0x5c0] sm:$0xf]
    %v305 = vld [vmem:[#allocation2 + $0x5c4] sm:$0xff]
    %v306 = vld [vmem:[#allocation2 + $0x5cc] sm:$0xff]
    %v307 = vld [vmem:[#allocation2 + $0x5d4] sm:$0xff]
    %v308 = vld [vmem:[#allocation2 + $0x5dc] sm:$0xff]
    %v309 = vld [vmem:[#allocation2 + $0x5e4] sm:$0xf]
    %v310 = vld [vmem:[#allocation2 + $0x5e8] sm:$0xff]
    %v311 = vld [vmem:[#allocation2 + $0x5f0] sm:$0xff]
    %v312 = vld [vmem:[#allocation2 + $0x5f8] sm:$0xff]
    %v313 = vld [vmem:[#allocation2 + $0x600] sm:$0xff]
    %v314 = vld [vmem:[#allocation2 + $0x608] sm:$0xf]
    %v315 = vld [vmem:[#allocation2 + $0x60c] sm:$0xff]
    %v316 = vld [vmem:[#allocation2 + $0x614] sm:$0xff]
    %v317 = vld [vmem:[#allocation2 + $0x61c] sm:$0xff]
    %v318 = vld [vmem:[#allocation2 + $0x624] sm:$0xff]
    %v319 = vld [vmem:[#allocation2 + $0x62c] sm:$0xf]
    %v320 = vld [vmem:[#allocation2 + $0x630] sm:$0xff]
    %v321 = vld [vmem:[#allocation2 + $0x638] sm:$0xff]
    %v322 = vld [vmem:[#allocation2 + $0x640] sm:$0xff]
    %v323 = vld [vmem:[#allocation2 + $0x648] sm:$0xff]
    %v324 = vld [vmem:[#allocation2 + $0x650] sm:$0xf]
    %v325 = vld [vmem:[#allocation2 + $0x654] sm:$0xff]
    %v326 = vld [vmem:[#allocation2 + $0x65c] sm:$0xff]
    %v327 = vld [vmem:[#allocation2 + $0x664] sm:$0xff]
    %v328 = vld [vmem:[#allocation2 + $0x66c] sm:$0xff]
    %v329 = vld [vmem:[#allocation2 + $0x674] sm:$0xf]
    %v330 = vld [vmem:[#allocation2 + $0x678] sm:$0xff]
    %v331 = vld [vmem:[#allocation2 + $0x680] sm:$0xff]
    %v332 = vld [vmem:[#allocation2 + $0x688] sm:$0xff]
    %v333 = vld [vmem:[#allocation2 + $0x690] sm:$0xff]
    %v334 = vld [vmem:[#allocation2 + $0x698] sm:$0xf]
    %v335 = vld [vmem:[#allocation2 + $0x69c] sm:$0xff]
    %v336 = vld [vmem:[#allocation2 + $0x6a4] sm:$0xff]
    %v337 = vld [vmem:[#allocation2 + $0x6ac] sm:$0xff]
    %v338 = vld [vmem:[#allocation2 + $0x6b4] sm:$0xff]
    %v339 = vld [vmem:[#allocation2 + $0x6bc] sm:$0xf]
    %v340 = vld [vmem:[#allocation2 + $0x6c0] sm:$0xff]
    %v341 = vld [vmem:[#allocation2 + $0x6c8] sm:$0xff]
    %v342 = vld [vmem:[#allocation2 + $0x6d0] sm:$0xff]
    %v343 = vld [vmem:[#allocation2 + $0x6d8] sm:$0xff]
    %v344 = vld [vmem:[#allocation2 + $0x6e0] sm:$0xf]
    %v345 = vld [vmem:[#allocation2 + $0x6e4] sm:$0xff]
    %v346 = vld [vmem:[#allocation2 + $0x6ec] sm:$0xff]
    %v347 = vld [vmem:[#allocation2 + $0x6f4] sm:$0xff]
    %v348 = vld [vmem:[#allocation2 + $0x6fc] sm:$0xff]
    %v349 = vld [vmem:[#allocation2 + $0x704] sm:$0xf]
    %v350 = vld [vmem:[#allocation2 + $0x708] sm:$0xff]
    %v351 = vld [vmem:[#allocation2 + $0x710] sm:$0xff]
    %v352 = vld [vmem:[#allocation2 + $0x718] sm:$0xff]
    %v353 = vld [vmem:[#allocation2 + $0x720] sm:$0xff]
    %v354 = vld [vmem:[#allocation2 + $0x728] sm:$0xf]
    %v355 = vld [vmem:[#allocation2 + $0x72c] sm:$0xff]
    %v356 = vld [vmem:[#allocation2 + $0x734] sm:$0xff]
    %v357 = vld [vmem:[#allocation2 + $0x73c] sm:$0xff]
    %v358 = vld [vmem:[#allocation2 + $0x744] sm:$0xff]
    %v359 = vld [vmem:[#allocation2 + $0x74c] sm:$0xf]
    %v360 = vld [vmem:[#allocation2 + $0x750] sm:$0xff]
    %v361 = vld [vmem:[#allocation2 + $0x758] sm:$0xff]
    %v362 = vld [vmem:[#allocation2 + $0x760] sm:$0xff]
    %v363 = vld [vmem:[#allocation2 + $0x768] sm:$0xff]
    %v364 = vld [vmem:[#allocation2 + $0x770] sm:$0xf]
    %v365 = vld [vmem:[#allocation2 + $0x774] sm:$0xff]
    %v366 = vld [vmem:[#allocation2 + $0x77c] sm:$0xff]
    %v367 = vld [vmem:[#allocation2 + $0x784] sm:$0xff]
    %v368 = vld [vmem:[#allocation2 + $0x78c] sm:$0xff]
    %v369 = vld [vmem:[#allocation2 + $0x794] sm:$0xf]
    %v370 = vld [vmem:[#allocation2 + $0x798] sm:$0xff]
    %v371 = vld [vmem:[#allocation2 + $0x7a0] sm:$0xff]
    %v372 = vld [vmem:[#allocation2 + $0x7a8] sm:$0xff]
    %v373 = vld [vmem:[#allocation2 + $0x7b0] sm:$0xff]
    %v374 = vld [vmem:[#allocation2 + $0x7b8] sm:$0xf]
    %v375 = vld [vmem:[#allocation2 + $0x7bc] sm:$0xff]
    %v376 = vld [vmem:[#allocation2 + $0x7c4] sm:$0xff]
    %v377 = vld [vmem:[#allocation2 + $0x7cc] sm:$0xff]
    %v378 = vld [vmem:[#allocation2 + $0x7d4] sm:$0xff]
    %v379 = vld [vmem:[#allocation2 + $0x7dc] sm:$0xf]
    %v380 = vld [vmem:[#allocation2 + $0x7e0] sm:$0xff]
    %v381 = vld [vmem:[#allocation2 + $0x7e8] sm:$0xff]
    %v382 = vld [vmem:[#allocation2 + $0x7f0] sm:$0xff]
    %v383 = vld [vmem:[#allocation2 + $0x7f8] sm:$0xff]
    %v384 = vld [vmem:[#allocation2 + $0x800] sm:$0xf]
    %v385 = vld [vmem:[#allocation2 + $0x804] sm:$0xff]
    %v386 = vld [vmem:[#allocation2 + $0x80c] sm:$0xff]
    %v387 = vld [vmem:[#allocation2 + $0x814] sm:$0xff]
    %v388 = vld [vmem:[#allocation2 + $0x81c] sm:$0xff]
    %v389 = vld [vmem:[#allocation2 + $0x824] sm:$0xf]
    %v390 = vld [vmem:[#allocation2 + $0x828] sm:$0xff]
    %v391 = vld [vmem:[#allocation2 + $0x830] sm:$0xff]
    %v392 = vld [vmem:[#allocation2 + $0x838] sm:$0xff]
    %v393 = vld [vmem:[#allocation2 + $0x840] sm:$0xff]
    %v394 = vld [vmem:[#allocation2 + $0x848] sm:$0xf]
    %v395 = vld [vmem:[#allocation2 + $0x84c] sm:$0xff]
    %v396 = vld [vmem:[#allocation2 + $0x854] sm:$0xff]
    %v397 = vld [vmem:[#allocation2 + $0x85c] sm:$0xff]
    %v398 = vld [vmem:[#allocation2 + $0x864] sm:$0xff]
    %v399 = vld [vmem:[#allocation2 + $0x86c] sm:$0xf]
    %v400 = vld [vmem:[#allocation2 + $0x870] sm:$0xff]
    %v401 = vld [vmem:[#allocation2 + $0x878] sm:$0xff]
    %v402 = vld [vmem:[#allocation2 + $0x880] sm:$0xff]
    %v403 = vld [vmem:[#allocation2 + $0x888] sm:$0xff]
    %v404 = vld [vmem:[#allocation2 + $0x890] sm:$0xf]
    %v405 = vld [vmem:[#allocation2 + $0x894] sm:$0xff]
    %v406 = vld [vmem:[#allocation2 + $0x89c] sm:$0xff]
    %v407 = vld [vmem:[#allocation2 + $0x8a4] sm:$0xff]
    %v408 = vld [vmem:[#allocation2 + $0x8ac] sm:$0xff]
    %v409 = vld [vmem:[#allocation2 + $0x8b4] sm:$0xf]
    %v410 = vld [vmem:[#allocation2 + $0x8b8] sm:$0xff]
    %v411 = vld [vmem:[#allocation2 + $0x8c0] sm:$0xff]
    %v412 = vld [vmem:[#allocation2 + $0x8c8] sm:$0xff]
    %v413 = vld [vmem:[#allocation2 + $0x8d0] sm:$0xff]
    %v414 = vld [vmem:[#allocation2 + $0x8d8] sm:$0xf]
    %v415 = vld [vmem:[#allocation2 + $0x8dc] sm:$0xff]
    %v416 = vld [vmem:[#allocation2 + $0x8e4] sm:$0xff]
    %v417 = vld [vmem:[#allocation2 + $0x8ec] sm:$0xff]
    %v418 = vld [vmem:[#allocation2 + $0x8f4] sm:$0xff]
    %v419 = vld [vmem:[#allocation2 + $0x8fc] sm:$0xf]
    %v740 = vunpack.c.l.b16 %v100
    %v741 = vunpack.c.h.b16 %v100
    %v742 = vunpack.c.l.b16 %v101
    %v743 = vunpack.c.h.b16 %v101
    %v744 = vunpack.c.l.b16 %v102
    %v745 = vunpack.c.h.b16 %v102
    %v746 = vunpack.c.l.b16 %v103
    %v747 = vunpack.c.h.b16 %v103
    %v748 = vunpack.c.l.b16 %v104
    %v749 = vunpack.c.l.b16 %v105
    %v750 = vunpack.c.h.b16 %v105
    %v751 = vunpack.c.l.b16 %v106
    %v752 = vunpack.c.h.b16 %v106
    %v753 = vunpack.c.l.b16 %v107
    %v754 = vunpack.c.h.b16 %v107
    %v755 = vunpack.c.l.b16 %v108
    %v756 = vunpack.c.h.b16 %v108
    %v757 = vunpack.c.l.b16 %v109
    %v758 = vunpack.c.l.b16 %v110
    %v759 = vunpack.c.h.b16 %v110
    %v760 = vunpack.c.l.b16 %v111
    %v761 = vunpack.c.h.b16 %v111
    %v762 = vunpack.c.l.b16 %v112
    %v763 = vunpack.c.h.b16 %v112
    %v764 = vunpack.c.l.b16 %v113
    %v765 = vunpack.c.h.b16 %v113
    %v766 = vunpack.c.l.b16 %v114
    %v767 = vunpack.c.l.b16 %v115
    %v768 = vunpack.c.h.b16 %v115
    %v769 = vunpack.c.l.b16 %v116
    %v770 = vunpack.c.h.b16 %v116
    %v771 = vunpack.c.l.b16 %v117
    %v772 = vunpack.c.h.b16 %v117
    %v773 = vunpack.c.l.b16 %v118
    %v774 = vunpack.c.h.b16 %v118
    %v775 = vunpack.c.l.b16 %v119
    %v776 = vunpack.c.l.b16 %v120
    %v777 = vunpack.c.h.b16 %v120
    %v778 = vunpack.c.l.b16 %v121
    %v779 = vunpack.c.h.b16 %v121
    %v780 = vunpack.c.l.b16 %v122
    %v781 = vunpack.c.h.b16 %v122
    %v782 = vunpack.c.l.b16 %v123
    %v783 = vunpack.c.h.b16 %v123
    %v784 = vunpack.c.l.b16 %v124
    %v785 = vunpack.c.l.b16 %v125
    %v786 = vunpack.c.h.b16 %v125
    %v787 = vunpack.c.l.b16 %v126
    %v788 = vunpack.c.h.b16 %v126
    %v789 = vunpack.c.l.b16 %v127
    %v790 = vunpack.c.h.b16 %v127
    %v791 = vunpack.c.l.b16 %v128
    %v792 = vunpack.c.h.b16 %v128
    %v793 = vunpack.c.l.b16 %v129
    %v794 = vunpack.c.l.b16 %v130
    %v795 = vunpack.c.h.b16 %v130
    %v796 = vunpack.c.l.b16 %v131
    %v797 = vunpack.c.h.b16 %v131
    %v798 = vunpack.c.l.b16 %v132
    %v799 = vunpack.c.h.b16 %v132
    %v800 = vunpack.c.l.b16 %v133
    %v801 = vunpack.c.h.b16 %v133
    %v802 = vunpack.c.l.b16 %v134
    %v803 = vunpack.c.l.b16 %v135
    %v804 = vunpack.c.h.b16 %v135
    %v805 = vunpack.c.l.b16 %v136
    %v806 = vunpack.c.h.b16 %v136
    %v807 = vunpack.c.l.b16 %v137
    %v808 = vunpack.c.h.b16 %v137
    %v809 = vunpack.c.l.b16 %v138
    %v810 = vunpack.c.h.b16 %v138
    %v811 = vunpack.c.l.b16 %v139
    %v812 = vunpack.c.l.b16 %v140
    %v813 = vunpack.c.h.b16 %v140
    %v814 = vunpack.c.l.b16 %v141
    %v815 = vunpack.c.h.b16 %v141
    %v816 = vunpack.c.l.b16 %v142
    %v817 = vunpack.c.h.b16 %v142
    %v818 = vunpack.c.l.b16 %v143
    %v819 = vunpack.c.h.b16 %v143
    %v820 = vunpack.c.l.b16 %v144
    %v821 = vunpack.c.l.b16 %v145
    %v822 = vunpack.c.h.b16 %v145
    %v823 = vunpack.c.l.b16 %v146
    %v824 = vunpack.c.h.b16 %v146
    %v825 = vunpack.c.l.b16 %v147
    %v826 = vunpack.c.h.b16 %v147
    %v827 = vunpack.c.l.b16 %v148
    %v828 = vunpack.c.h.b16 %v148
    %v829 = vunpack.c.l.b16 %v149
    %v830 = vunpack.c.l.b16 %v150
    %v831 = vunpack.c.h.b16 %v150
    %v832 = vunpack.c.l.b16 %v151
    %v833 = vunpack.c.h.b16 %v151
    %v834 = vunpack.c.l.b16 %v152
    %v835 = vunpack.c.h.b16 %v152
    %v836 = vunpack.c.l.b16 %v153
    %v837 = vunpack.c.h.b16 %v153
    %v838 = vunpack.c.l.b16 %v154
    %v839 = vunpack.c.l.b16 %v155
    %v840 = vunpack.c.h.b16 %v155
    %v841 = vunpack.c.l.b16 %v156
    %v842 = vunpack.c.h.b16 %v156
    %v843 = vunpack.c.l.b16 %v157
    %v844 = vunpack.c.h.b16 %v157
    %v845 = vunpack.c.l.b16 %v158
    %v846 = vunpack.c.h.b16 %v158
    %v847 = vunpack.c.l.b16 %v159
    %v848 = vunpack.c.l.b16 %v160
    %v849 = vunpack.c.h.b16 %v160
    %v850 = vunpack.c.l.b16 %v161
    %v851 = vunpack.c.h.b16 %v161
    %v852 = vunpack.c.l.b16 %v162
    %v853 = vunpack.c.h.b16 %v162
    %v854 = vunpack.c.l.b16 %v163
    %v855 = vunpack.c.h.b16 %v163
    %v856 = vunpack.c.l.b16 %v164
    %v857 = vunpack.c.l.b16 %v165
    %v858 = vunpack.c.h.b16 %v165
    %v859 = vunpack.c.l.b16 %v166
    %v860 = vunpack.c.h.b16 %v166
    %v861 = vunpack.c.l.b16 %v167
    %v862 = vunpack.c.h.b16 %v167
    %v863 = vunpack.c.l.b16 %v168
    %v864 = vunpack.c.h.b16 %v168
    %v865 = vunpack.c.l.b16 %v169
    %v866 = vunpack.c.l.b16 %v170
    %v867 = vunpack.c.h.b16 %v170
    %v868 = vunpack.c.l.b16 %v171
    %v869 = vunpack.c.h.b16 %v171
    %v870 = vunpack.c.l.b16 %v172
    %v871 = vunpack.c.h.b16 %v172
    %v872 = vunpack.c.l.b16 %v173
    %v873 = vunpack.c.h.b16 %v173
    %v874 = vunpack.c.l.b16 %v174
    %v875 = vunpack.c.l.b16 %v175
    %v876 = vunpack.c.h.b16 %v175
    %v877 = vunpack.c.l.b16 %v176
    %v878 = vunpack.c.h.b16 %v176
    %v879 = vunpack.c.l.b16 %v177
    %v880 = vunpack.c.h.b16 %v177
    %v881 = vunpack.c.l.b16 %v178
    %v882 = vunpack.c.h.b16 %v178
    %v883 = vunpack.c.l.b16 %v179
    %v884 = vunpack.c.l.b16 %v180
    %v885 = vunpack.c.h.b16 %v180
    %v886 = vunpack.c.l.b16 %v181
    %v887 = vunpack.c.h.b16 %v181
    %v888 = vunpack.c.l.b16 %v182
    %v889 = vunpack.c.h.b16 %v182
    %v890 = vunpack.c.l.b16 %v183
    %v891 = vunpack.c.h.b16 %v183
    %v892 = vunpack.c.l.b16 %v184
    %v893 = vunpack.c.l.b16 %v185
    %v894 = vunpack.c.h.b16 %v185
    %v895 = vunpack.c.l.b16 %v186
    %v896 = vunpack.c.h.b16 %v186
    %v897 = vunpack.c.l.b16 %v187
    %v898 = vunpack.c.h.b16 %v187
    %v899 = vunpack.c.l.b16 %v188
    %v900 = vunpack.c.h.b16 %v188
    %v901 = vunpack.c.l.b16 %v189
    %v902 = vunpack.c.l.b16 %v190
    %v903 = vunpack.c.h.b16 %v190
    %v904 = vunpack.c.l.b16 %v191
    %v905 = vunpack.c.h.b16 %v191
    %v906 = vunpack.c.l.b16 %v192
    %v907 = vunpack.c.h.b16 %v192
    %v908 = vunpack.c.l.b16 %v193
    %v909 = vunpack.c.h.b16 %v193
    %v910 = vunpack.c.l.b16 %v194
    %v911 = vunpack.c.l.b16 %v195
    %v912 = vunpack.c.h.b16 %v195
    %v913 = vunpack.c.l.b16 %v196
    %v914 = vunpack.c.h.b16 %v196
    %v915 = vunpack.c.l.b16 %v197
    %v916 = vunpack.c.h.b16 %v197
    %v917 = vunpack.c.l.b16 %v198
    %v918 = vunpack.c.h.b16 %v198
    %v919 = vunpack.c.l.b16 %v199
    %v920 = vunpack.c.l.b16 %v200
    %v921 = vunpack.c.h.b16 %v200
    %v922 = vunpack.c.l.b16 %v201
    %v923 = vunpack.c.h.b16 %v201
    %v924 = vunpack.c.l.b16 %v202
    %v925 = vunpack.c.h.b16 %v202
    %v926 = vunpack.c.l.b16 %v203
    %v927 = vunpack.c.h.b16 %v203
    %v928 = vunpack.c.l.b16 %v204
    %v929 = vunpack.c.l.b16 %v205
    %v930 = vunpack.c.h.b16 %v205
    %v931 = vunpack.c.l.b16 %v206
    %v932 = vunpack.c.h.b16 %v206
    %v933 = vunpack.c.l.b16 %v207
    %v934 = vunpack.c.h.b16 %v207
    %v935 = vunpack.c.l.b16 %v208
    %v936 = vunpack.c.h.b16 %v208
    %v937 = vunpack.c.l.b16 %v209
    %v938 = vunpack.c.l.b16 %v210
    %v939 = vunpack.c.h.b16 %v210
    %v940 = vunpack.c.l.b16 %v211
    %v941 = vunpack.c.h.b16 %v211
    %v942 = vunpack.c.l.b16 %v212
    %v943 = vunpack.c.h.b16 %v212
    %v944 = vunpack.c.l.b16 %v213
    %v945 = vunpack.c.h.b16 %v213
    %v946 = vunpack.c.l.b16 %v214
    %v947 = vunpack.c.l.b16 %v215
    %v948 = vunpack.c.h.b16 %v215
    %v949 = vunpack.c.l.b16 %v216
    %v950 = vunpack.c.h.b16 %v216
    %v951 = vunpack.c.l.b16 %v217
    %v952 = vunpack.c.h.b16 %v217
    %v953 = vunpack.c.l.b16 %v218
    %v954 = vunpack.c.h.b16 %v218
    %v955 = vunpack.c.l.b16 %v219
    %v956 = vunpack.c.l.b16 %v220
    %v957 = vunpack.c.h.b16 %v220
    %v958 = vunpack.c.l.b16 %v221
    %v959 = vunpack.c.h.b16 %v221
    %v960 = vunpack.c.l.b16 %v222
    %v961 = vunpack.c.h.b16 %v222
    %v962 = vunpack.c.l.b16 %v223
    %v963 = vunpack.c.h.b16 %v223
    %v964 = vunpack.c.l.b16 %v224
    %v965 = vunpack.c.l.b16 %v225
    %v966 = vunpack.c.h.b16 %v225
    %v967 = vunpack.c.l.b16 %v226
    %v968 = vunpack.c.h.b16 %v226
    %v969 = vunpack.c.l.b16 %v227
    %v970 = vunpack.c.h.b16 %v227
    %v971 = vunpack.c.l.b16 %v228
    %v972 = vunpack.c.h.b16 %v228
    %v973 = vunpack.c.l.b16 %v229
    %v974 = vunpack.c.l.b16 %v230
    %v975 = vunpack.c.h.b16 %v230
    %v976 = vunpack.c.l.b16 %v231
    %v977 = vunpack.c.h.b16 %v231
    %v978 = vunpack.c.l.b16 %v232
    %v979 = vunpack.c.h.b16 %v232
    %v980 = vunpack.c.l.b16 %v233
    %v981 = vunpack.c.h.b16 %v233
    %v982 = vunpack.c.l.b16 %v234
    %v983 = vunpack.c.l.b16 %v235
    %v984 = vunpack.c.h.b16 %v235
    %v985 = vunpack.c.l.b16 %v236
    %v986 = vunpack.c.h.b16 %v236
    %v987 = vunpack.c.l.b16 %v237
    %v988 = vunpack.c.h.b16 %v237
    %v989 = vunpack.c.l.b16 %v238
    %v990 = vunpack.c.h.b16 %v238
    %v991 = vunpack.c.l.b16 %v239
    %v992 = vunpack.c.l.b16 %v240
    %v993 = vunpack.c.h.b16 %v240
    %v994 = vunpack.c.l.b16 %v241
    %v995 = vunpack.c.h.b16 %v241
    %v996 = vunpack.c.l.b16 %v242
    %v997 = vunpack.c.h.b16 %v242
    %v998 = vunpack.c.l.b16 %v243
    %v999 = vunpack.c.h.b16 %v243
    %v1000 = vunpack.c.l.b16 %v244
    %v1001 = vunpack.c.l.b16 %v245
    %v1002 = vunpack.c.h.b16 %v245
    %v1003 = vunpack.c.l.b16 %v246
    %v1004 = vunpack.c.h.b16 %v246
    %v1005 = vunpack.c.l.b16 %v247
    %v1006 = vunpack.c.h.b16 %v247
    %v1007 = vunpack.c.l.b16 %v248
    %v1008 = vunpack.c.h.b16 %v248
    %v1009 = vunpack.c.l.b16 %v249
    %v1010 = vunpack.c.l.b16 %v250
    %v1011 = vunpack.c.h.b16 %v250
    %v1012 = vunpack.c.l.b16 %v251
    %v1013 = vunpack.c.h.b16 %v251
    %v1014 = vunpack.c.l.b16 %v252
    %v1015 = vunpack.c.h.b16 %v252
    %v1016 = vunpack.c.l.b16 %v253
    %v1017 = vunpack.c.h.b16 %v253
    %v1018 = vunpack.c.l.b16 %v254
    %v1019 = vunpack.c.l.b16 %v255
    %v1020 = vunpack.c.h.b16 %v255
    %v1021 = vunpack.c.l.b16 %v256
    %v1022 = vunpack.c.h.b16 %v256
    %v1023 = vunpack.c.l.b16 %v257
    %v1024 = vunpack.c.h.b16 %v257
    %v1025 = vunpack.c.l.b16 %v258
    %v1026 = vunpack.c.h.b16 %v258
    %v1027 = vunpack.c.l.b16 %v259
    %v1028 = vunpack.c.l.b16 %v260
    %v1029 = vunpack.c.h.b16 %v260
    %v1030 = vunpack.c.l.b16 %v261
    %v1031 = vunpack.c.h.b16 %v261
    %v1032 = vunpack.c.l.b16 %v262
    %v1033 = vunpack.c.h.b16 %v262
    %v1034 = vunpack.c.l.b16 %v263
    %v1035 = vunpack.c.h.b16 %v263
    %v1036 = vunpack.c.l.b16 %v264
    %v1037 = vunpack.c.l.b16 %v265
    %v1038 = vunpack.c.h.b16 %v265
    %v1039 = vunpack.c.l.b16 %v266
    %v1040 = vunpack.c.h.b16 %v266
    %v1041 = vunpack.c.l.b16 %v267
    %v1042 = vunpack.c.h.b16 %v267
    %v1043 = vunpack.c.l.b16 %v268
    %v1044 = vunpack.c.h.b16 %v268
    %v1045 = vunpack.c.l.b16 %v269
    %v1046 = vunpack.c.l.b16 %v270
    %v1047 = vunpack.c.h.b16 %v270
    %v1048 = vunpack.c.l.b16 %v271
    %v1049 = vunpack.c.h.b16 %v271
    %v1050 = vunpack.c.l.b16 %v272
    %v1051 = vunpack.c.h.b16 %v272
    %v1052 = vunpack.c.l.b16 %v273
    %v1053 = vunpack.c.h.b16 %v273
    %v1054 = vunpack.c.l.b16 %v274
    %v1055 = vunpack.c.l.b16 %v275
    %v1056 = vunpack.c.h.b16 %v275
    %v1057 = vunpack.c.l.b16 %v276
    %v1058 = vunpack.c.h.b16 %v276
    %v1059 = vunpack.c.l.b16 %v277
    %v1060 = vunpack.c.h.b16 %v277
    %v1061 = vunpack.c.l.b16 %v278
    %v1062 = vunpack.c.h.b16 %v278
    %v1063 = vunpack.c.l.b16 %v279
    %v1064 = vunpack.c.l.b16 %v280
    %v1065 = vunpack.c.h.b16 %v280
    %v1066 = vunpack.c.l.b16 %v281
    %v1067 = vunpack.c.h.b16 %v281
    %v1068 = vunpack.c.l.b16 %v282
    %v1069 = vunpack.c.h.b16 %v282
    %v1070 = vunpack.c.l.b16 %v283
    %v1071 = vunpack.c.h.b16 %v283
    %v1072 = vunpack.c.l.b16 %v284
    %v1073 = vunpack.c.l.b16 %v285
    %v1074 = vunpack.c.h.b16 %v285
    %v1075 = vunpack.c.l.b16 %v286
    %v1076 = vunpack.c.h.b16 %v286
    %v1077 = vunpack.c.l.b16 %v287
    %v1078 = vunpack.c.h.b16 %v287
    %v1079 = vunpack.c.l.b16 %v288
    %v1080 = vunpack.c.h.b16 %v288
    %v1081 = vunpack.c.l.b16 %v289
    %v1082 = vunpack.c.l.b16 %v290
    %v1083 = vunpack.c.h.b16 %v290
    %v1084 = vunpack.c.l.b16 %v291
    %v1085 = vunpack.c.h.b16 %v291
    %v1086 = vunpack.c.l.b16 %v292
    %v1087 = vunpack.c.h.b16 %v292
    %v1088 = vunpack.c.l.b16 %v293
    %v1089 = vunpack.c.h.b16 %v293
    %v1090 = vunpack.c.l.b16 %v294
    %v1091 = vunpack.c.l.b16 %v295
    %v1092 = vunpack.c.h.b16 %v295
    %v1093 = vunpack.c.l.b16 %v296
    %v1094 = vunpack.c.h.b16 %v296
    %v1095 = vunpack.c.l.b16 %v297
    %v1096 = vunpack.c.h.b16 %v297
    %v1097 = vunpack.c.l.b16 %v298
    %v1098 = vunpack.c.h.b16 %v298
    %v1099 = vunpack.c.l.b16 %v299
    %v1100 = vunpack.c.l.b16 %v300
    %v1101 = vunpack.c.h.b16 %v300
    %v1102 = vunpack.c.l.b16 %v301
    %v1103 = vunpack.c.h.b16 %v301
    %v1104 = vunpack.c.l.b16 %v302
    %v1105 = vunpack.c.h.b16 %v302
    %v1106 = vunpack.c.l.b16 %v303
    %v1107 = vunpack.c.h.b16 %v303
    %v1108 = vunpack.c.l.b16 %v304
    %v1109 = vunpack.c.l.b16 %v305
    %v1110 = vunpack.c.h.b16 %v305
    %v1111 = vunpack.c.l.b16 %v306
    %v1112 = vunpack.c.h.b16 %v306
    %v1113 = vunpack.c.l.b16 %v307
    %v1114 = vunpack.c.h.b16 %v307
    %v1115 = vunpack.c.l.b16 %v308
    %v1116 = vunpack.c.h.b16 %v308
    %v1117 = vunpack.c.l.b16 %v309
    %v1118 = vunpack.c.l.b16 %v310
    %v1119 = vunpack.c.h.b16 %v310
    %v1120 = vunpack.c.l.b16 %v311
    %v1121 = vunpack.c.h.b16 %v311
    %v1122 = vunpack.c.l.b16 %v312
    %v1123 = vunpack.c.h.b16 %v312
    %v1124 = vunpack.c.l.b16 %v313
    %v1125 = vunpack.c.h.b16 %v313
    %v1126 = vunpack.c.l.b16 %v314
    %v1127 = vunpack.c.l.b16 %v315
    %v1128 = vunpack.c.h.b16 %v315
    %v1129 = vunpack.c.l.b16 %v316
    %v1130 = vunpack.c.h.b16 %v316
    %v1131 = vunpack.c.l.b16 %v317
    %v1132 = vunpack.c.h.b16 %v317
    %v1133 = vunpack.c.l.b16 %v318
    %v1134 = vunpack.c.h.b16 %v318
    %v1135 = vunpack.c.l.b16 %v319
    %v1136 = vunpack.c.l.b16 %v320
    %v1137 = vunpack.c.h.b16 %v320
    %v1138 = vunpack.c.l.b16 %v321
    %v1139 = vunpack.c.h.b16 %v321
    %v1140 = vunpack.c.l.b16 %v322
    %v1141 = vunpack.c.h.b16 %v322
    %v1142 = vunpack.c.l.b16 %v323
    %v1143 = vunpack.c.h.b16 %v323
    %v1144 = vunpack.c.l.b16 %v324
    %v1145 = vunpack.c.l.b16 %v325
    %v1146 = vunpack.c.h.b16 %v325
    %v1147 = vunpack.c.l.b16 %v326
    %v1148 = vunpack.c.h.b16 %v326
    %v1149 = vunpack.c.l.b16 %v327
    %v1150 = vunpack.c.h.b16 %v327
    %v1151 = vunpack.c.l.b16 %v328
    %v1152 = vunpack.c.h.b16 %v328
    %v1153 = vunpack.c.l.b16 %v329
    %v1154 = vunpack.c.l.b16 %v330
    %v1155 = vunpack.c.h.b16 %v330
    %v1156 = vunpack.c.l.b16 %v331
    %v1157 = vunpack.c.h.b16 %v331
    %v1158 = vunpack.c.l.b16 %v332
    %v1159 = vunpack.c.h.b16 %v332
    %v1160 = vunpack.c.l.b16 %v333
    %v1161 = vunpack.c.h.b16 %v333
    %v1162 = vunpack.c.l.b16 %v334
    %v1163 = vunpack.c.l.b16 %v335
    %v1164 = vunpack.c.h.b16 %v335
    %v1165 = vunpack.c.l.b16 %v336
    %v1166 = vunpack.c.h.b16 %v336
    %v1167 = vunpack.c.l.b16 %v337
    %v1168 = vunpack.c.h.b16 %v337
    %v1169 = vunpack.c.l.b16 %v338
    %v1170 = vunpack.c.h.b16 %v338
    %v1171 = vunpack.c.l.b16 %v339
    %v1172 = vunpack.c.l.b16 %v340
    %v1173 = vunpack.c.h.b16 %v340
    %v1174 = vunpack.c.l.b16 %v341
    %v1175 = vunpack.c.h.b16 %v341
    %v1176 = vunpack.c.l.b16 %v342
    %v1177 = vunpack.c.h.b16 %v342
    %v1178 = vunpack.c.l.b16 %v343
    %v1179 = vunpack.c.h.b16 %v343
    %v1180 = vunpack.c.l.b16 %v344
    %v1181 = vunpack.c.l.b16 %v345
    %v1182 = vunpack.c.h.b16 %v345
    %v1183 = vunpack.c.l.b16 %v346
    %v1184 = vunpack.c.h.b16 %v346
    %v1185 = vunpack.c.l.b16 %v347
    %v1186 = vunpack.c.h.b16 %v347
    %v1187 = vunpack.c.l.b16 %v348
    %v1188 = vunpack.c.h.b16 %v348
    %v1189 = vunpack.c.l.b16 %v349
    %v1190 = vunpack.c.l.b16 %v350
    %v1191 = vunpack.c.h.b16 %v350
    %v1192 = vunpack.c.l.b16 %v351
    %v1193 = vunpack.c.h.b16 %v351
    %v1194 = vunpack.c.l.b16 %v352
    %v1195 = vunpack.c.h.b16 %v352
    %v1196 = vunpack.c.l.b16 %v353
    %v1197 = vunpack.c.h.b16 %v353
    %v1198 = vunpack.c.l.b16 %v354
    %v1199 = vunpack.c.l.b16 %v355
    %v1200 = vunpack.c.h.b16 %v355
    %v1201 = vunpack.c.l.b16 %v356
    %v1202 = vunpack.c.h.b16 %v356
    %v1203 = vunpack.c.l.b16 %v357
    %v1204 = vunpack.c.h.b16 %v357
    %v1205 = vunpack.c.l.b16 %v358
    %v1206 = vunpack.c.h.b16 %v358
    %v1207 = vunpack.c.l.b16 %v359
    %v1208 = vunpack.c.l.b16 %v360
    %v1209 = vunpack.c.h.b16 %v360
    %v1210 = vunpack.c.l.b16 %v361
    %v1211 = vunpack.c.h.b16 %v361
    %v1212 = vunpack.c.l.b16 %v362
    %v1213 = vunpack.c.h.b16 %v362
    %v1214 = vunpack.c.l.b16 %v363
    %v1215 = vunpack.c.h.b16 %v363
    %v1216 = vunpack.c.l.b16 %v364
    %v1217 = vunpack.c.l.b16 %v365
    %v1218 = vunpack.c.h.b16 %v365
    %v1219 = vunpack.c.l.b16 %v366
    %v1220 = vunpack.c.h.b16 %v366
    %v1221 = vunpack.c.l.b16 %v367
    %v1222 = vunpack.c.h.b16 %v367
    %v1223 = vunpack.c.l.b16 %v368
    %v1224 = vunpack.c.h.b16 %v368
    %v1225 = vunpack.c.l.b16 %v369
    %v1226 = vunpack.c.l.b16 %v370
    %v1227 = vunpack.c.h.b16 %v370
    %v1228 = vunpack.c.l.b16 %v371
    %v1229 = vunpack.c.h.b16 %v371
    %v1230 = vunpack.c.l.b16 %v372
    %v1231 = vunpack.c.h.b16 %v372
    %v1232 = vunpack.c.l.b16 %v373
    %v1233 = vunpack.c.h.b16 %v373
    %v1234 = vunpack.c.l.b16 %v374
    %v1235 = vunpack.c.l.b16 %v375
    %v1236 = vunpack.c.h.b16 %v375
    %v1237 = vunpack.c.l.b16 %v376
    %v1238 = vunpack.c.h.b16 %v376
    %v1239 = vunpack.c.l.b16 %v377
    %v1240 = vunpack.c.h.b16 %v377
    %v1241 = vunpack.c.l.b16 %v378
    %v1242 = vunpack.c.h.b16 %v378
    %v1243 = vunpack.c.l.b16 %v379
    %v1244 = vunpack.c.l.b16 %v380
    %v1245 = vunpack.c.h.b16 %v380
    %v1246 = vunpack.c.l.b16 %v381
    %v1247 = vunpack.c.h.b16 %v381
    %v1248 = vunpack.c.l.b16 %v382
    %v1249 = vunpack.c.h.b16 %v382
    %v1250 = vunpack.c.l.b16 %v383
    %v1251 = vunpack.c.h.b16 %v383
    %v1252 = vunpack.c.l.b16 %v384
    %v1253 = vunpack.c.l.b16 %v385
    %v1254 = vunpack.c.h.b16 %v385
    %v1255 = vunpack.c.l.b16 %v386
    %v1256 = vunpack.c.h.b16 %v386
    %v1257 = vunpack.c.l.b16 %v387
    %v1258 = vunpack.c.h.b16 %v387
    %v1259 = vunpack.c.l.b16 %v388
    %v1260 = vunpack.c.h.b16 %v388
    %v1261 = vunpack.c.l.b16 %v389
    %v1262 = vunpack.c.l.b16 %v390
    %v1263 = vunpack.c.h.b16 %v390
    %v1264 = vunpack.c.l.b16 %v391
    %v1265 = vunpack.c.h.b16 %v391
    %v1266 = vunpack.c.l.b16 %v392
    %v1267 = vunpack.c.h.b16 %v392
    %v1268 = vunpack.c.l.b16 %v393
    %v1269 = vunpack.c.h.b16 %v393
    %v1270 = vunpack.c.l.b16 %v394
    %v1271 = vunpack.c.l.b16 %v395
    %v1272 = vunpack.c.h.b16 %v395
    %v1273 = vunpack.c.l.b16 %v396
    %v1274 = vunpack.c.h.b16 %v396
    %v1275 = vunpack.c.l.b16 %v397
    %v1276 = vunpack.c.h.b16 %v397
    %v1277 = vunpack.c.l.b16 %v398
    %v1278 = vunpack.c.h.b16 %v398
    %v1279 = vunpack.c.l.b16 %v399
    %v1280 = vunpack.c.l.b16 %v400
    %v1281 = vunpack.c.h.b16 %v400
    %v1282 = vunpack.c.l.b16 %v401
    %v1283 = vunpack.c.h.b16 %v401
    %v1284 = vunpack.c.l.b16 %v402
    %v1285 = vunpack.c.h.b16 %v402
    %v1286 = vunpack.c.l.b16 %v403
    %v1287 = vunpack.c.h.b16 %v403
    %v1288 = vunpack.c.l.b16 %v404
    %v1289 = vunpack.c.l.b16 %v405
    %v1290 = vunpack.c.h.b16 %v405
    %v1291 = vunpack.c.l.b16 %v406
    %v1292 = vunpack.c.h.b16 %v406
    %v1293 = vunpack.c.l.b16 %v407
    %v1294 = vunpack.c.h.b16 %v407
    %v1295 = vunpack.c.l.b16 %v408
    %v1296 = vunpack.c.h.b16 %v408
    %v1297 = vunpack.c.l.b16 %v409
    %v1298 = vunpack.c.l.b16 %v410
    %v1299 = vunpack.c.h.b16 %v410
    %v1300 = vunpack.c.l.b16 %v411
    %v1301 = vunpack.c.h.b16 %v411
    %v1302 = vunpack.c.l.b16 %v412
    %v1303 = vunpack.c.h.b16 %v412
    %v1304 = vunpack.c.l.b16 %v413
    %v1305 = vunpack.c.h.b16 %v413
    %v1306 = vunpack.c.l.b16 %v414
    %v1307 = vunpack.c.l.b16 %v415
    %v1308 = vunpack.c.h.b16 %v415
    %v1309 = vunpack.c.l.b16 %v416
    %v1310 = vunpack.c.h.b16 %v416
    %v1311 = vunpack.c.l.b16 %v417
    %v1312 = vunpack.c.h.b16 %v417
    %v1313 = vunpack.c.l.b16 %v418
    %v1314 = vunpack.c.h.b16 %v418
    %v1315 = vunpack.c.l.b16 %v419
    %v1316 = vpack.c.b16 %v749, %v740
    %v1317 = vpack.c.b16 %v750, %v741
    %v1318 = vpack.c.b16 %v751, %v742
    %v1319 = vpack.c.b16 %v752, %v743
    %v1320 = vpack.c.b16 %v753, %v744
    %v1321 = vpack.c.b16 %v754, %v745
    %v1322 = vpack.c.b16 %v755, %v746
    %v1323 = vpack.c.b16 %v756, %v747
    %v1324 = vpack.c.b16 %v757, %v748
    %v1325 = vpack.c.b16 %v767, %v758
    %v1326 = vpack.c.b16 %v768, %v759
    %v1327 = vpack.c.b16 %v769, %v760
    %v1328 = vpack.c.b16 %v770, %v761
    %v1329 = vpack.c.b16 %v771, %v762
    %v1330 = vpack.c.b16 %v772, %v763
    %v1331 = vpack.c.b16 %v773, %v764
    %v1332 = vpack.c.b16 %v774, %v765
    %v1333 = vpack.c.b16 %v775, %v766
    %v1334 = vpack.c.b16 %v785, %v776
    %v1335 = vpack.c.b16 %v786, %v777
    %v1336 = vpack.c.b16 %v787, %v778
    %v1337 = vpack.c.b16 %v788, %v779
    %v1338 = vpack.c.b16 %v789, %v780
    %v1339 = vpack.c.b16 %v790, %v781
    %v1340 = vpack.c.b16 %v791, %v782
    %v1341 = vpack.c.b16 %v792, %v783
    %v1342 = vpack.c.b16 %v793, %v784
    %v1343 = vpack.c.b16 %v803, %v794
    %v1344 = vpack.c.b16 %v804, %v795
    %v1345 = vpack.c.b16 %v805, %v796
    %v1346 = vpack.c.b16 %v806, %v797
    %v1347 = vpack.c.b16 %v807, %v798
    %v1348 = vpack.c.b16 %v808, %v799
    %v1349 = vpack.c.b16 %v809, %v800
    %v1350 = vpack.c.b16 %v810, %v801
    %v1351 = vpack.c.b16 %v811, %v802
    %v1352 = vpack.c.b16 %v821, %v812
    %v1353 = vpack.c.b16 %v822, %v813
    %v1354 = vpack.c.b16 %v823, %v814
    %v1355 = vpack.c.b16 %v824, %v815
    %v1356 = vpack.c.b16 %v825, %v816
    %v1357 = vpack.c.b16 %v826, %v817
    %v1358 = vpack.c.b16 %v827, %v818
    %v1359 = vpack.c.b16 %v828, %v819
    %v1360 = vpack.c.b16 %v829, %v820
    %v1361 = vpack.c.b16 %v839, %v830
    %v1362 = vpack.c.b16 %v840, %v831
    %v1363 = vpack.c.b16 %v841, %v832
    %v1364 = vpack.c.b16 %v842, %v833
    %v1365 = vpack.c.b16 %v843, %v834
    %v1366 = vpack.c.b16 %v844, %v835
    %v1367 = vpack.c.b16 %v845, %v836
    %v1368 = vpack.c.b16 %v846, %v837
    %v1369 = vpack.c.b16 %v847, %v838
    %v1370 = vpack.c.b16 %v857, %v848
    %v1371 = vpack.c.b16 %v858, %v849
    %v1372 = vpack.c.b16 %v859, %v850
    %v1373 = vpack.c.b16 %v860, %v851
    %v1374 = vpack.c.b16 %v861, %v852
    %v1375 = vpack.c.b16 %v862, %v853
    %v1376 = vpack.c.b16 %v863, %v854
    %v1377 = vpack.c.b16 %v864, %v855
    %v1378 = vpack.c.b16 %v865, %v856
    %v1379 = vpack.c.b16 %v875, %v866
    %v1380 = vpack.c.b16 %v876, %v867
    %v1381 = vpack.c.b16 %v877, %v868
    %v1382 = vpack.c.b16 %v878, %v869
    %v1383 = vpack.c.b16 %v879, %v870
    %v1384 = vpack.c.b16 %v880, %v871
    %v1385 = vpack.c.b16 %v881, %v872
    %v1386 = vpack.c.b16 %v882, %v873
    %v1387 = vpack.c.b16 %v883, %v874
    %v1388 = vpack.c.b16 %v893, %v884
    %v1389 = vpack.c.b16 %v894, %v885
    %v1390 = vpack.c.b16 %v895, %v886
    %v1391 = vpack.c.b16 %v896, %v887
    %v1392 = vpack.c.b16 %v897, %v888
    %v1393 = vpack.c.b16 %v898, %v889
    %v1394 = vpack.c.b16 %v899, %v890
    %v1395 = vpack.c.b16 %v900, %v891
    %v1396 = vpack.c.b16 %v901, %v892
    %v1397 = vpack.c.b16 %v911, %v902
    %v1398 = vpack.c.b16 %v912, %v903
    %v1399 = vpack.c.b16 %v913, %v904
    %v1400 = vpack.c.b16 %v914, %v905
    %v1401 = vpack.c.b16 %v915, %v906
    %v1402 = vpack.c.b16 %v916, %v907
    %v1403 = vpack.c.b16 %v917, %v908
    %v1404 = vpack.c.b16 %v918, %v909
    %v1405 = vpack.c.b16 %v919, %v910
    %v1406 = vpack.c.b16 %v929, %v920
    %v1407 = vpack.c.b16 %v930, %v921
    %v1408 = vpack.c.b16 %v931, %v922
    %v1409 = vpack.c.b16 %v932, %v923
    %v1410 = vpack.c.b16 %v933, %v924
    %v1411 = vpack.c.b16 %v934, %v925
    %v1412 = vpack.c.b16 %v935, %v926
    %v1413 = vpack.c.b16 %v936, %v927
    %v1414 = vpack.c.b16 %v937, %v928
    %v1415 = vpack.c.b16 %v947, %v938
    %v1416 = vpack.c.b16 %v948, %v939
    %v1417 = vpack.c.b16 %v949, %v940
    %v1418 = vpack.c.b16 %v950, %v941
    %v1419 = vpack.c.b16 %v951, %v942
    %v1420 = vpack.c.b16 %v952, %v943
    %v1421 = vpack.c.b16 %v953, %v944
    %v1422 = vpack.c.b16 %v954, %v945
    %v1423 = vpack.c.b16 %v955, %v946
    %v1424 = vpack.c.b16 %v965, %v956
    %v1425 = vpack.c.b16 %v966, %v957
    %v1426 = vpack.c.b16 %v967, %v958
    %v1427 = vpack.c.b16 %v968, %v959
    %v1428 = vpack.c.b16 %v969, %v960
    %v1429 = vpack.c.b16 %v970, %v961
    %v1430 = vpack.c.b16 %v971, %v962
    %v1431 = vpack.c.b16 %v972, %v963
    %v1432 = vpack.c.b16 %v973, %v964
    %v1433 = vpack.c.b16 %v983, %v974
    %v1434 = vpack.c.b16 %v984, %v975
    %v1435 = vpack.c.b16 %v985, %v976
    %v1436 = vpack.c.b16 %v986, %v977
    %v1437 = vpack.c.b16 %v987, %v978
    %v1438 = vpack.c.b16 %v988, %v979
    %v1439 = vpack.c.b16 %v989, %v980
    %v1440 = vpack.c.b16 %v990, %v981
    %v1441 = vpack.c.b16 %v991, %v982
    %v1442 = vpack.c.b16 %v1001, %v992
    %v1443 = vpack.c.b16 %v1002, %v993
    %v1444 = vpack.c.b16 %v1003, %v994
    %v1445 = vpack.c.b16 %v1004, %v995
    %v1446 = vpack.c.b16 %v1005, %v996
    %v1447 = vpack.c.b16 %v1006, %v997
    %v1448 = vpack.c.b16 %v1007, %v998
    %v1449 = vpack.c.b16 %v1008, %v999
    %v1450 = vpack.c.b16 %v1009, %v1000
    %v1451 = vpack.c.b16 %v1019, %v1010
    %v1452 = vpack.c.b16 %v1020, %v1011
    %v1453 = vpack.c.b16 %v1021, %v1012
    %v1454 = vpack.c.b16 %v1022, %v1013
    %v1455 = vpack.c.b16 %v1023, %v1014
    %v1456 = vpack.c.b16 %v1024, %v1015
    %v1457 = vpack.c.b16 %v1025, %v1016
    %v1458 = vpack.c.b16 %v1026, %v1017
    %v1459 = vpack.c.b16 %v1027, %v1018
    %v1460 = vpack.c.b16 %v1037, %v1028
    %v1461 = vpack.c.b16 %v1038, %v1029
    %v1462 = vpack.c.b16 %v1039, %v1030
    %v1463 = vpack.c.b16 %v1040, %v1031
    %v1464 = vpack.c.b16 %v1041, %v1032
    %v1465 = vpack.c.b16 %v1042, %v1033
    %v1466 = vpack.c.b16 %v1043, %v1034
    %v1467 = vpack.c.b16 %v1044, %v1035
    %v1468 = vpack.c.b16 %v1045, %v1036
    %v1469 = vpack.c.b16 %v1055, %v1046
    %v1470 = vpack.c.b16 %v1056, %v1047
    %v1471 = vpack.c.b16 %v1057, %v1048
    %v1472 = vpack.c.b16 %v1058, %v1049
    %v1473 = vpack.c.b16 %v1059, %v1050
    %v1474 = vpack.c.b16 %v1060, %v1051
    %v1475 = vpack.c.b16 %v1061, %v1052
    %v1476 = vpack.c.b16 %v1062, %v1053
    %v1477 = vpack.c.b16 %v1063, %v1054
    %v1478 = vpack.c.b16 %v1073, %v1064
    %v1479 = vpack.c.b16 %v1074, %v1065
    %v1480 = vpack.c.b16 %v1075, %v1066
    %v1481 = vpack.c.b16 %v1076, %v1067
    %v1482 = vpack.c.b16 %v1077, %v1068
    %v1483 = vpack.c.b16 %v1078, %v1069
    %v1484 = vpack.c.b16 %v1079, %v1070
    %v1485 = vpack.c.b16 %v1080, %v1071
    %v1486 = vpack.c.b16 %v1081, %v1072
    %v1487 = vpack.c.b16 %v1091, %v1082
    %v1488 = vpack.c.b16 %v1092, %v1083
    %v1489 = vpack.c.b16 %v1093, %v1084
    %v1490 = vpack.c.b16 %v1094, %v1085
    %v1491 = vpack.c.b16 %v1095, %v1086
    %v1492 = vpack.c.b16 %v1096, %v1087
    %v1493 = vpack.c.b16 %v1097, %v1088
    %v1494 = vpack.c.b16 %v1098, %v1089
    %v1495 = vpack.c.b16 %v1099, %v1090
    %v1496 = vpack.c.b16 %v1109, %v1100
    %v1497 = vpack.c.b16 %v1110, %v1101
    %v1498 = vpack.c.b16 %v1111, %v1102
    %v1499 = vpack.c.b16 %v1112, %v1103
    %v1500 = vpack.c.b16 %v1113, %v1104
    %v1501 = vpack.c.b16 %v1114, %v1105
    %v1502 = vpack.c.b16 %v1115, %v1106
    %v1503 = vpack.c.b16 %v1116, %v1107
    %v1504 = vpack.c.b16 %v1117, %v1108
    %v1505 = vpack.c.b16 %v1127, %v1118
    %v1506 = vpack.c.b16 %v1128, %v1119
    %v1507 = vpack.c.b16 %v1129, %v1120
    %v1508 = vpack.c.b16 %v1130, %v1121
    %v1509 = vpack.c.b16 %v1131, %v1122
    %v1510 = vpack.c.b16 %v1132, %v1123
    %v1511 = vpack.c.b16 %v1133, %v1124
    %v1512 = vpack.c.b16 %v1134, %v1125
    %v1513 = vpack.c.b16 %v1135, %v1126
    %v1514 = vpack.c.b16 %v1145, %v1136
    %v1515 = vpack.c.b16 %v1146, %v1137
    %v1516 = vpack.c.b16 %v1147, %v1138
    %v1517 = vpack.c.b16 %v1148, %v1139
    %v1518 = vpack.c.b16 %v1149, %v1140
    %v1519 = vpack.c.b16 %v1150, %v1141
    %v1520 = vpack.c.b16 %v1151, %v1142
    %v1521 = vpack.c.b16 %v1152, %v1143
    %v1522 = vpack.c.b16 %v1153, %v1144
    %v1523 = vpack.c.b16 %v1163, %v1154
    %v1524 = vpack.c.b16 %v1164, %v1155
    %v1525 = vpack.c.b16 %v1165, %v1156
    %v1526 = vpack.c.b16 %v1166, %v1157
    %v1527 = vpack.c.b16 %v1167, %v1158
    %v1528 = vpack.c.b16 %v1168, %v1159
    %v1529 = vpack.c.b16 %v1169, %v1160
    %v1530 = vpack.c.b16 %v1170, %v1161
    %v1531 = vpack.c.b16 %v1171, %v1162
    %v1532 = vpack.c.b16 %v1181, %v1172
    %v1533 = vpack.c.b16 %v1182, %v1173
    %v1534 = vpack.c.b16 %v1183, %v1174
    %v1535 = vpack.c.b16 %v1184, %v1175
    %v1536 = vpack.c.b16 %v1185, %v1176
    %v1537 = vpack.c.b16 %v1186, %v1177
    %v1538 = vpack.c.b16 %v1187, %v1178
    %v1539 = vpack.c.b16 %v1188, %v1179
    %v1540 = vpack.c.b16 %v1189, %v1180
    %v1541 = vpack.c.b16 %v1199, %v1190
    %v1542 = vpack.c.b16 %v1200, %v1191
    %v1543 = vpack.c.b16 %v1201, %v1192
    %v1544 = vpack.c.b16 %v1202, %v1193
    %v1545 = vpack.c.b16 %v1203, %v1194
    %v1546 = vpack.c.b16 %v1204, %v1195
    %v1547 = vpack.c.b16 %v1205, %v1196
    %v1548 = vpack.c.b16 %v1206, %v1197
    %v1549 = vpack.c.b16 %v1207, %v1198
    %v1550 = vpack.c.b16 %v1217, %v1208
    %v1551 = vpack.c.b16 %v1218, %v1209
    %v1552 = vpack.c.b16 %v1219, %v1210
    %v1553 = vpack.c.b16 %v1220, %v1211
    %v1554 = vpack.c.b16 %v1221, %v1212
    %v1555 = vpack.c.b16 %v1222, %v1213
    %v1556 = vpack.c.b16 %v1223, %v1214
    %v1557 = vpack.c.b16 %v1224, %v1215
    %v1558 = vpack.c.b16 %v1225, %v1216
    %v1559 = vpack.c.b16 %v1235, %v1226
    %v1560 = vpack.c.b16 %v1236, %v1227
    %v1561 = vpack.c.b16 %v1237, %v1228
    %v1562 = vpack.c.b16 %v1238, %v1229
    %v1563 = vpack.c.b16 %v1239, %v1230
    %v1564 = vpack.c.b16 %v1240, %v1231
    %v1565 = vpack.c.b16 %v1241, %v1232
    %v1566 = vpack.c.b16 %v1242, %v1233
    %v1567 = vpack.c.b16 %v1243, %v1234
    %v1568 = vpack.c.b16 %v1253, %v1244
    %v1569 = vpack.c.b16 %v1254, %v1245
    %v1570 = vpack.c.b16 %v1255, %v1246
    %v1571 = vpack.c.b16 %v1256, %v1247
    %v1572 = vpack.c.b16 %v1257, %v1248
    %v1573 = vpack.c.b16 %v1258, %v1249
    %v1574 = vpack.c.b16 %v1259, %v1250
    %v1575 = vpack.c.b16 %v1260, %v1251
    %v1576 = vpack.c.b16 %v1261, %v1252
    %v1577 = vpack.c.b16 %v1271, %v1262
    %v1578 = vpack.c.b16 %v1272, %v1263
    %v1579 = vpack.c.b16 %v1273, %v1264
    %v1580 = vpack.c.b16 %v1274, %v1265
    %v1581 = vpack.c.b16 %v1275, %v1266
    %v1582 = vpack.c.b16 %v1276, %v1267
    %v1583 = vpack.c.b16 %v1277, %v1268
    %v1584 = vpack.c.b16 %v1278, %v1269
    %v1585 = vpack.c.b16 %v1279, %v1270
    %v1586 = vpack.c.b16 %v1289, %v1280
    %v1587 = vpack.c.b16 %v1290, %v1281
    %v1588 = vpack.c.b16 %v1291, %v1282
    %v1589 = vpack.c.b16 %v1292, %v1283
    %v1590 = vpack.c.b16 %v1293, %v1284
    %v1591 = vpack.c.b16 %v1294, %v1285
    %v1592 = vpack.c.b16 %v1295, %v1286
    %v1593 = vpack.c.b16 %v1296, %v1287
    %v1594 = vpack.c.b16 %v1297, %v1288
    %v1595 = vpack.c.b16 %v1307, %v1298
    %v1596 = vpack.c.b16 %v1308, %v1299
    %v1597 = vpack.c.b16 %v1309, %v1300
    %v1598 = vpack.c.b16 %v1310, %v1301
    %v1599 = vpack.c.b16 %v1311, %v1302
    %v1600 = vpack.c.b16 %v1312, %v1303
    %v1601 = vpack.c.b16 %v1313, %v1304
    %v1602 = vpack.c.b16 %v1314, %v1305
    %v1603 = vpack.c.b16 %v1315, %v1306
    %1892 = vmatprep.subr.bf16.mxu0 %v1317
    %1893 = vmatpush1.bf16.msra.mxu0 %v1316
    %1894 = vmatprep.subr.bf16.mxu0 %v1326
    %1895 = vmatpush1.bf16.msra.mxu0 %v1325
    %1896 = vmatprep.subr.bf16.mxu0 %v1335
    %1897 = vmatpush1.bf16.msra.mxu0 %v1334
    %1898 = vmatprep.subr.bf16.mxu0 %v1344
    %1899 = vmatpush1.bf16.msra.mxu0 %v1343
    %1900 = vmatprep.subr.bf16.mxu0 %v1353
    %1901 = vmatpush1.bf16.msra.mxu0 %v1352
    %1902 = vmatprep.subr.bf16.mxu0 %v1362
    %1903 = vmatpush1.bf16.msra.mxu0 %v1361
    %1904 = vmatprep.subr.bf16.mxu0 %v1371
    %1905 = vmatpush1.bf16.msra.mxu0 %v1370
    %1906 = vmatprep.subr.bf16.mxu0 %v1380
    %1907 = vmatpush1.bf16.msra.mxu0 %v1379
    %1908 = vmatprep.subr.bf16.mxu0 %v1389
    %1909 = vmatpush1.bf16.msra.mxu0 %v1388
    %1910 = vmatprep.subr.bf16.mxu0 %v1398
    %1911 = vmatpush1.bf16.msra.mxu0 %v1397
    %1912 = vmatprep.subr.bf16.mxu0 %v1407
    %1913 = vmatpush1.bf16.msra.mxu0 %v1406
    %1914 = vmatprep.subr.bf16.mxu0 %v1416
    %1915 = vmatpush1.bf16.msra.mxu0 %v1415
    %1916 = vmatprep.subr.bf16.mxu0 %v1425
    %1917 = vmatpush1.bf16.msra.mxu0 %v1424
    %1918 = vmatprep.subr.bf16.mxu0 %v1434
    %1919 = vmatpush1.bf16.msra.mxu0 %v1433
    %1920 = vmatprep.subr.bf16.mxu0 %v1443
    %1921 = vmatpush1.bf16.msra.mxu0 %v1442
    %1922 = vmatprep.subr.bf16.mxu0 %v1452
    %1923 = vmatpush1.bf16.msra.mxu0 %v1451
    %1924 = vmatprep.mubr.bf16.mxu0 %v97
    %1925 = vmatmul.mubr.bf16.gmra.mrb[0].mxu0 %v96
    %v1926 = vpop.f32.mrb[0].mxu0
    %v1927 = vadd.f32 0.0, %v1926
    %v1928 = vpop.f32.mrb[0].mxu0
    %v1929 = vadd.f32 0.0, %v1928
    %v1930 = vpop.f32.mrb[0].mxu0
    %v1931 = vadd.f32 0.0, %v1930
    %v1932 = vpop.f32.mrb[0].mxu0
    %v1933 = vadd.f32 0.0, %v1932
    %1934 = vdwg.mxu0
    %1935 = vmatprep.subr.bf16.mxu0 %v1461
    %1936 = vmatpush1.bf16.msra.mxu0 %v1460
    %1937 = vmatprep.subr.bf16.mxu0 %v1470
    %1938 = vmatpush1.bf16.msra.mxu0 %v1469
    %1939 = vmatprep.subr.bf16.mxu0 %v1479
    %1940 = vmatpush1.bf16.msra.mxu0 %v1478
    %1941 = vmatprep.subr.bf16.mxu0 %v1488
    %1942 = vmatpush1.bf16.msra.mxu0 %v1487
    %1943 = vmatprep.subr.bf16.mxu0 %v1497
    %1944 = vmatpush1.bf16.msra.mxu0 %v1496
    %1945 = vmatprep.subr.bf16.mxu0 %v1506
    %1946 = vmatpush1.bf16.msra.mxu0 %v1505
    %1947 = vmatprep.subr.bf16.mxu0 %v1515
    %1948 = vmatpush1.bf16.msra.mxu0 %v1514
    %1949 = vmatprep.subr.bf16.mxu0 %v1524
    %1950 = vmatpush1.bf16.msra.mxu0 %v1523
    %1951 = vmatprep.subr.bf16.mxu0 %v1533
    %1952 = vmatpush1.bf16.msra.mxu0 %v1532
    %1953 = vmatprep.subr.bf16.mxu0 %v1542
    %1954 = vmatpush1.bf16.msra.mxu0 %v1541
    %1955 = vmatprep.subr.bf16.mxu0 %v1551
    %1956 = vmatpush1.bf16.msra.mxu0 %v1550
    %1957 = vmatprep.subr.bf16.mxu0 %v1560
    %1958 = vmatpush1.bf16.msra.mxu0 %v1559
    %1959 = vmatprep.subr.bf16.mxu0 %v1569
    %1960 = vmatpush1.bf16.msra.mxu0 %v1568
    %1961 = vmatprep.subr.bf16.mxu0 %v1578
    %1962 = vmatpush1.bf16.msra.mxu0 %v1577
    %1963 = vmatprep.subr.bf16.mxu0 %v1587
    %1964 = vmatpush1.bf16.msra.mxu0 %v1586
    %1965 = vmatprep.subr.bf16.mxu0 %v1596
    %1966 = vmatpush1.bf16.msra.mxu0 %v1595
    %1967 = vmatprep.mubr.bf16.mxu0 %v99
    %1968 = vmatmul.mubr.bf16.gmra.mrb[0].mxu0 %v98
    %v1969 = vpop.f32.mrb[0].mxu0
    %v1970 = vadd.f32 %v1927, %v1969
    %v1971 = vpop.f32.mrb[0].mxu0
    %v1972 = vadd.f32 %v1929, %v1971
    %v1973 = vpop.f32.mrb[0].mxu0
    %v1974 = vadd.f32 %v1931, %v1973
    %v1975 = vpop.f32.mrb[0].mxu0
    %v1976 = vadd.f32 %v1933, %v1975
    %1977 = vdwg.mxu0
    %1978 = vmatprep.subr.bf16.mxu0 %v1319
    %1979 = vmatpush1.bf16.msra.mxu0 %v1318
    %1980 = vmatprep.subr.bf16.mxu0 %v1328
    %1981 = vmatpush1.bf16.msra.mxu0 %v1327
    %1982 = vmatprep.subr.bf16.mxu0 %v1337
    %1983 = vmatpush1.bf16.msra.mxu0 %v1336
    %1984 = vmatprep.subr.bf16.mxu0 %v1346
    %1985 = vmatpush1.bf16.msra.mxu0 %v1345
    %1986 = vmatprep.subr.bf16.mxu0 %v1355
    %1987 = vmatpush1.bf16.msra.mxu0 %v1354
    %1988 = vmatprep.subr.bf16.mxu0 %v1364
    %1989 = vmatpush1.bf16.msra.mxu0 %v1363
    %1990 = vmatprep.subr.bf16.mxu0 %v1373
    %1991 = vmatpush1.bf16.msra.mxu0 %v1372
    %1992 = vmatprep.subr.bf16.mxu0 %v1382
    %1993 = vmatpush1.bf16.msra.mxu0 %v1381
    %1994 = vmatprep.subr.bf16.mxu0 %v1391
    %1995 = vmatpush1.bf16.msra.mxu0 %v1390
    %1996 = vmatprep.subr.bf16.mxu0 %v1400
    %1997 = vmatpush1.bf16.msra.mxu0 %v1399
    %1998 = vmatprep.subr.bf16.mxu0 %v1409
    %1999 = vmatpush1.bf16.msra.mxu0 %v1408
    %2000 = vmatprep.subr.bf16.mxu0 %v1418
    %2001 = vmatpush1.bf16.msra.mxu0 %v1417
    %2002 = vmatprep.subr.bf16.mxu0 %v1427
    %2003 = vmatpush1.bf16.msra.mxu0 %v1426
    %2004 = vmatprep.subr.bf16.mxu0 %v1436
    %2005 = vmatpush1.bf16.msra.mxu0 %v1435
    %2006 = vmatprep.subr.bf16.mxu0 %v1445
    %2007 = vmatpush1.bf16.msra.mxu0 %v1444
    %2008 = vmatprep.subr.bf16.mxu0 %v1454
    %2009 = vmatpush1.bf16.msra.mxu0 %v1453
    %2010 = vmatprep.mubr.bf16.mxu0 %v97
    %2011 = vmatmul.mubr.bf16.gmra.mrb[0].mxu0 %v96
    %v2012 = vpop.f32.mrb[0].mxu0
    %v2013 = vadd.f32 0.0, %v2012
    %v2014 = vpop.f32.mrb[0].mxu0
    %v2015 = vadd.f32 0.0, %v2014
    %v2016 = vpop.f32.mrb[0].mxu0
    %v2017 = vadd.f32 0.0, %v2016
    %v2018 = vpop.f32.mrb[0].mxu0
    %v2019 = vadd.f32 0.0, %v2018
    %2020 = vdwg.mxu0
    %2021 = vmatprep.subr.bf16.mxu0 %v1463
    %2022 = vmatpush1.bf16.msra.mxu0 %v1462
    %2023 = vmatprep.subr.bf16.mxu0 %v1472
    %2024 = vmatpush1.bf16.msra.mxu0 %v1471
    %2025 = vmatprep.subr.bf16.mxu0 %v1481
    %2026 = vmatpush1.bf16.msra.mxu0 %v1480
    %2027 = vmatprep.subr.bf16.mxu0 %v1490
    %2028 = vmatpush1.bf16.msra.mxu0 %v1489
    %2029 = vmatprep.subr.bf16.mxu0 %v1499
    %2030 = vmatpush1.bf16.msra.mxu0 %v1498
    %2031 = vmatprep.subr.bf16.mxu0 %v1508
    %2032 = vmatpush1.bf16.msra.mxu0 %v1507
    %2033 = vmatprep.subr.bf16.mxu0 %v1517
    %2034 = vmatpush1.bf16.msra.mxu0 %v1516
    %2035 = vmatprep.subr.bf16.mxu0 %v1526
    %2036 = vmatpush1.bf16.msra.mxu0 %v1525
    %2037 = vmatprep.subr.bf16.mxu0 %v1535
    %2038 = vmatpush1.bf16.msra.mxu0 %v1534
    %2039 = vmatprep.subr.bf16.mxu0 %v1544
    %2040 = vmatpush1.bf16.msra.mxu0 %v1543
    %2041 = vmatprep.subr.bf16.mxu0 %v1553
    %2042 = vmatpush1.bf16.msra.mxu0 %v1552
    %2043 = vmatprep.subr.bf16.mxu0 %v1562
    %2044 = vmatpush1.bf16.msra.mxu0 %v1561
    %2045 = vmatprep.subr.bf16.mxu0 %v1571
    %2046 = vmatpush1.bf16.msra.mxu0 %v1570
    %2047 = vmatprep.subr.bf16.mxu0 %v1580
    %2048 = vmatpush1.bf16.msra.mxu0 %v1579
    %2049 = vmatprep.subr.bf16.mxu0 %v1589
    %2050 = vmatpush1.bf16.msra.mxu0 %v1588
    %2051 = vmatprep.subr.bf16.mxu0 %v1598
    %2052 = vmatpush1.bf16.msra.mxu0 %v1597
    %2053 = vmatprep.mubr.bf16.mxu0 %v99
    %2054 = vmatmul.mubr.bf16.gmra.mrb[0].mxu0 %v98
    %v2055 = vpop.f32.mrb[0].mxu0
    %v2056 = vadd.f32 %v2013, %v2055
    %v2057 = vpop.f32.mrb[0].mxu0
    %v2058 = vadd.f32 %v2015, %v2057
    %v2059 = vpop.f32.mrb[0].mxu0
    %v2060 = vadd.f32 %v2017, %v2059
    %v2061 = vpop.f32.mrb[0].mxu0
    %v2062 = vadd.f32 %v2019, %v2061
    %2063 = vdwg.mxu0
    %2064 = vmatprep.subr.bf16.mxu0 %v1321
    %2065 = vmatpush1.bf16.msra.mxu0 %v1320
    %2066 = vmatprep.subr.bf16.mxu0 %v1330
    %2067 = vmatpush1.bf16.msra.mxu0 %v1329
    %2068 = vmatprep.subr.bf16.mxu0 %v1339
    %2069 = vmatpush1.bf16.msra.mxu0 %v1338
    %2070 = vmatprep.subr.bf16.mxu0 %v1348
    %2071 = vmatpush1.bf16.msra.mxu0 %v1347
    %2072 = vmatprep.subr.bf16.mxu0 %v1357
    %2073 = vmatpush1.bf16.msra.mxu0 %v1356
    %2074 = vmatprep.subr.bf16.mxu0 %v1366
    %2075 = vmatpush1.bf16.msra.mxu0 %v1365
    %2076 = vmatprep.subr.bf16.mxu0 %v1375
    %2077 = vmatpush1.bf16.msra.mxu0 %v1374
    %2078 = vmatprep.subr.bf16.mxu0 %v1384
    %2079 = vmatpush1.bf16.msra.mxu0 %v1383
    %2080 = vmatprep.subr.bf16.mxu0 %v1393
    %2081 = vmatpush1.bf16.msra.mxu0 %v1392
    %2082 = vmatprep.subr.bf16.mxu0 %v1402
    %2083 = vmatpush1.bf16.msra.mxu0 %v1401
    %2084 = vmatprep.subr.bf16.mxu0 %v1411
    %2085 = vmatpush1.bf16.msra.mxu0 %v1410
    %2086 = vmatprep.subr.bf16.mxu0 %v1420
    %2087 = vmatpush1.bf16.msra.mxu0 %v1419
    %2088 = vmatprep.subr.bf16.mxu0 %v1429
    %2089 = vmatpush1.bf16.msra.mxu0 %v1428
    %2090 = vmatprep.subr.bf16.mxu0 %v1438
    %2091 = vmatpush1.bf16.msra.mxu0 %v1437
    %2092 = vmatprep.subr.bf16.mxu0 %v1447
    %2093 = vmatpush1.bf16.msra.mxu0 %v1446
    %2094 = vmatprep.subr.bf16.mxu0 %v1456
    %2095 = vmatpush1.bf16.msra.mxu0 %v1455
    %2096 = vmatprep.mubr.bf16.mxu0 %v97
    %2097 = vmatmul.mubr.bf16.gmra.mrb[0].mxu0 %v96
    %v2098 = vpop.f32.mrb[0].mxu0
    %v2099 = vadd.f32 0.0, %v2098
    %v2100 = vpop.f32.mrb[0].mxu0
    %v2101 = vadd.f32 0.0, %v2100
    %v2102 = vpop.f32.mrb[0].mxu0
    %v2103 = vadd.f32 0.0, %v2102
    %v2104 = vpop.f32.mrb[0].mxu0
    %v2105 = vadd.f32 0.0, %v2104
    %2106 = vdwg.mxu0
    %2107 = vmatprep.subr.bf16.mxu0 %v1465
    %2108 = vmatpush1.bf16.msra.mxu0 %v1464
    %2109 = vmatprep.subr.bf16.mxu0 %v1474
    %2110 = vmatpush1.bf16.msra.mxu0 %v1473
    %2111 = vmatprep.subr.bf16.mxu0 %v1483
    %2112 = vmatpush1.bf16.msra.mxu0 %v1482
    %2113 = vmatprep.subr.bf16.mxu0 %v1492
    %2114 = vmatpush1.bf16.msra.mxu0 %v1491
    %2115 = vmatprep.subr.bf16.mxu0 %v1501
    %2116 = vmatpush1.bf16.msra.mxu0 %v1500
    %2117 = vmatprep.subr.bf16.mxu0 %v1510
    %2118 = vmatpush1.bf16.msra.mxu0 %v1509
    %2119 = vmatprep.subr.bf16.mxu0 %v1519
    %2120 = vmatpush1.bf16.msra.mxu0 %v1518
    %2121 = vmatprep.subr.bf16.mxu0 %v1528
    %2122 = vmatpush1.bf16.msra.mxu0 %v1527
    %2123 = vmatprep.subr.bf16.mxu0 %v1537
    %2124 = vmatpush1.bf16.msra.mxu0 %v1536
    %2125 = vmatprep.subr.bf16.mxu0 %v1546
    %2126 = vmatpush1.bf16.msra.mxu0 %v1545
    %2127 = vmatprep.subr.bf16.mxu0 %v1555
    %2128 = vmatpush1.bf16.msra.mxu0 %v1554
    %2129 = vmatprep.subr.bf16.mxu0 %v1564
    %2130 = vmatpush1.bf16.msra.mxu0 %v1563
    %2131 = vmatprep.subr.bf16.mxu0 %v1573
    %2132 = vmatpush1.bf16.msra.mxu0 %v1572
    %2133 = vmatprep.subr.bf16.mxu0 %v1582
    %2134 = vmatpush1.bf16.msra.mxu0 %v1581
    %2135 = vmatprep.subr.bf16.mxu0 %v1591
    %2136 = vmatpush1.bf16.msra.mxu0 %v1590
    %2137 = vmatprep.subr.bf16.mxu0 %v1600
    %2138 = vmatpush1.bf16.msra.mxu0 %v1599
    %2139 = vmatprep.mubr.bf16.mxu0 %v99
    %2140 = vmatmul.mubr.bf16.gmra.mrb[0].mxu0 %v98
    %v2141 = vpop.f32.mrb[0].mxu0
    %v2142 = vadd.f32 %v2099, %v2141
    %v2143 = vpop.f32.mrb[0].mxu0
    %v2144 = vadd.f32 %v2101, %v2143
    %v2145 = vpop.f32.mrb[0].mxu0
    %v2146 = vadd.f32 %v2103, %v2145
    %v2147 = vpop.f32.mrb[0].mxu0
    %v2148 = vadd.f32 %v2105, %v2147
    %2149 = vdwg.mxu0
    %2150 = vmatprep.subr.bf16.mxu0 %v1323
    %2151 = vmatpush1.bf16.msra.mxu0 %v1322
    %2152 = vmatprep.subr.bf16.mxu0 %v1332
    %2153 = vmatpush1.bf16.msra.mxu0 %v1331
    %2154 = vmatprep.subr.bf16.mxu0 %v1341
    %2155 = vmatpush1.bf16.msra.mxu0 %v1340
    %2156 = vmatprep.subr.bf16.mxu0 %v1350
    %2157 = vmatpush1.bf16.msra.mxu0 %v1349
    %2158 = vmatprep.subr.bf16.mxu0 %v1359
    %2159 = vmatpush1.bf16.msra.mxu0 %v1358
    %2160 = vmatprep.subr.bf16.mxu0 %v1368
    %2161 = vmatpush1.bf16.msra.mxu0 %v1367
    %2162 = vmatprep.subr.bf16.mxu0 %v1377
    %2163 = vmatpush1.bf16.msra.mxu0 %v1376
    %2164 = vmatprep.subr.bf16.mxu0 %v1386
    %2165 = vmatpush1.bf16.msra.mxu0 %v1385
    %2166 = vmatprep.subr.bf16.mxu0 %v1395
    %2167 = vmatpush1.bf16.msra.mxu0 %v1394
    %2168 = vmatprep.subr.bf16.mxu0 %v1404
    %2169 = vmatpush1.bf16.msra.mxu0 %v1403
    %2170 = vmatprep.subr.bf16.mxu0 %v1413
    %2171 = vmatpush1.bf16.msra.mxu0 %v1412
    %2172 = vmatprep.subr.bf16.mxu0 %v1422
    %2173 = vmatpush1.bf16.msra.mxu0 %v1421
    %2174 = vmatprep.subr.bf16.mxu0 %v1431
    %2175 = vmatpush1.bf16.msra.mxu0 %v1430
    %2176 = vmatprep.subr.bf16.mxu0 %v1440
    %2177 = vmatpush1.bf16.msra.mxu0 %v1439
    %2178 = vmatprep.subr.bf16.mxu0 %v1449
    %2179 = vmatpush1.bf16.msra.mxu0 %v1448
    %2180 = vmatprep.subr.bf16.mxu0 %v1458
    %2181 = vmatpush1.bf16.msra.mxu0 %v1457
    %2182 = vmatprep.mubr.bf16.mxu0 %v97
    %2183 = vmatmul.mubr.bf16.gmra.mrb[0].mxu0 %v96
    %v2184 = vpop.f32.mrb[0].mxu0
    %v2185 = vadd.f32 0.0, %v2184
    %v2186 = vpop.f32.mrb[0].mxu0
    %v2187 = vadd.f32 0.0, %v2186
    %v2188 = vpop.f32.mrb[0].mxu0
    %v2189 = vadd.f32 0.0, %v2188
    %v2190 = vpop.f32.mrb[0].mxu0
    %v2191 = vadd.f32 0.0, %v2190
    %2192 = vdwg.mxu0
    %2193 = vmatprep.subr.bf16.mxu0 %v1467
    %2194 = vmatpush1.bf16.msra.mxu0 %v1466
    %2195 = vmatprep.subr.bf16.mxu0 %v1476
    %2196 = vmatpush1.bf16.msra.mxu0 %v1475
    %2197 = vmatprep.subr.bf16.mxu0 %v1485
    %2198 = vmatpush1.bf16.msra.mxu0 %v1484
    %2199 = vmatprep.subr.bf16.mxu0 %v1494
    %2200 = vmatpush1.bf16.msra.mxu0 %v1493
    %2201 = vmatprep.subr.bf16.mxu0 %v1503
    %2202 = vmatpush1.bf16.msra.mxu0 %v1502
    %2203 = vmatprep.subr.bf16.mxu0 %v1512
    %2204 = vmatpush1.bf16.msra.mxu0 %v1511
    %2205 = vmatprep.subr.bf16.mxu0 %v1521
    %2206 = vmatpush1.bf16.msra.mxu0 %v1520
    %2207 = vmatprep.subr.bf16.mxu0 %v1530
    %2208 = vmatpush1.bf16.msra.mxu0 %v1529
    %2209 = vmatprep.subr.bf16.mxu0 %v1539
    %2210 = vmatpush1.bf16.msra.mxu0 %v1538
    %2211 = vmatprep.subr.bf16.mxu0 %v1548
    %2212 = vmatpush1.bf16.msra.mxu0 %v1547
    %2213 = vmatprep.subr.bf16.mxu0 %v1557
    %2214 = vmatpush1.bf16.msra.mxu0 %v1556
    %2215 = vmatprep.subr.bf16.mxu0 %v1566
    %2216 = vmatpush1.bf16.msra.mxu0 %v1565
    %2217 = vmatprep.subr.bf16.mxu0 %v1575
    %2218 = vmatpush1.bf16.msra.mxu0 %v1574
    %2219 = vmatprep.subr.bf16.mxu0 %v1584
    %2220 = vmatpush1.bf16.msra.mxu0 %v1583
    %2221 = vmatprep.subr.bf16.mxu0 %v1593
    %2222 = vmatpush1.bf16.msra.mxu0 %v1592
    %2223 = vmatprep.subr.bf16.mxu0 %v1602
    %2224 = vmatpush1.bf16.msra.mxu0 %v1601
    %2225 = vmatprep.mubr.bf16.mxu0 %v99
    %2226 = vmatmul.mubr.bf16.gmra.mrb[0].mxu0 %v98
    %v2227 = vpop.f32.mrb[0].mxu0
    %v2228 = vadd.f32 %v2185, %v2227
    %v2229 = vpop.f32.mrb[0].mxu0
    %v2230 = vadd.f32 %v2187, %v2229
    %v2231 = vpop.f32.mrb[0].mxu0
    %v2232 = vadd.f32 %v2189, %v2231
    %v2233 = vpop.f32.mrb[0].mxu0
    %v2234 = vadd.f32 %v2191, %v2233
    %2235 = vdwg.mxu0
    %2236 = vmatprep.subr.bf16.mxu0 0
    %2237 = vmatpush1.bf16.msra.mxu0 %v1324
    %2238 = vmatprep.subr.bf16.mxu0 0
    %2239 = vmatpush1.bf16.msra.mxu0 %v1333
    %2240 = vmatprep.subr.bf16.mxu0 0
    %2241 = vmatpush1.bf16.msra.mxu0 %v1342
    %2242 = vmatprep.subr.bf16.mxu0 0
    %2243 = vmatpush1.bf16.msra.mxu0 %v1351
    %2244 = vmatprep.subr.bf16.mxu0 0
    %2245 = vmatpush1.bf16.msra.mxu0 %v1360
    %2246 = vmatprep.subr.bf16.mxu0 0
    %2247 = vmatpush1.bf16.msra.mxu0 %v1369
    %2248 = vmatprep.subr.bf16.mxu0 0
    %2249 = vmatpush1.bf16.msra.mxu0 %v1378
    %2250 = vmatprep.subr.bf16.mxu0 0
    %2251 = vmatpush1.bf16.msra.mxu0 %v1387
    %2252 = vmatprep.subr.bf16.mxu0 0
    %2253 = vmatpush1.bf16.msra.mxu0 %v1396
    %2254 = vmatprep.subr.bf16.mxu0 0
    %2255 = vmatpush1.bf16.msra.mxu0 %v1405
    %2256 = vmatprep.subr.bf16.mxu0 0
    %2257 = vmatpush1.bf16.msra.mxu0 %v1414
    %2258 = vmatprep.subr.bf16.mxu0 0
    %2259 = vmatpush1.bf16.msra.mxu0 %v1423
    %2260 = vmatprep.subr.bf16.mxu0 0
    %2261 = vmatpush1.bf16.msra.mxu0 %v1432
    %2262 = vmatprep.subr.bf16.mxu0 0
    %2263 = vmatpush1.bf16.msra.mxu0 %v1441
    %2264 = vmatprep.subr.bf16.mxu0 0
    %2265 = vmatpush1.bf16.msra.mxu0 %v1450
    %2266 = vmatprep.subr.bf16.mxu0 0
    %2267 = vmatpush1.bf16.msra.mxu0 %v1459
    %2268 = vmatprep.mubr.bf16.mxu0 %v97
    %2269 = vmatmul.mubr.bf16.gmra.mrb[0].mxu0 %v96
    %v2270 = vpop.f32.mrb[0].mxu0
    %v2271 = vadd.f32 0.0, %v2270
    %v2272 = vpop.f32.mrb[0].mxu0
    %v2273 = vpop.f32.mrb[0].mxu0
    %v2274 = vadd.f32 0.0, %v2273
    %v2275 = vpop.f32.mrb[0].mxu0
    %2276 = vdwg.mxu0
    %2277 = vmatprep.subr.bf16.mxu0 0
    %2278 = vmatpush1.bf16.msra.mxu0 %v1468
    %2279 = vmatprep.subr.bf16.mxu0 0
    %2280 = vmatpush1.bf16.msra.mxu0 %v1477
    %2281 = vmatprep.subr.bf16.mxu0 0
    %2282 = vmatpush1.bf16.msra.mxu0 %v1486
    %2283 = vmatprep.subr.bf16.mxu0 0
    %2284 = vmatpush1.bf16.msra.mxu0 %v1495
    %2285 = vmatprep.subr.bf16.mxu0 0
    %2286 = vmatpush1.bf16.msra.mxu0 %v1504
    %2287 = vmatprep.subr.bf16.mxu0 0
    %2288 = vmatpush1.bf16.msra.mxu0 %v1513
    %2289 = vmatprep.subr.bf16.mxu0 0
    %2290 = vmatpush1.bf16.msra.mxu0 %v1522
    %2291 = vmatprep.subr.bf16.mxu0 0
    %2292 = vmatpush1.bf16.msra.mxu0 %v1531
    %2293 = vmatprep.subr.bf16.mxu0 0
    %2294 = vmatpush1.bf16.msra.mxu0 %v1540
    %2295 = vmatprep.subr.bf16.mxu0 0
    %2296 = vmatpush1.bf16.msra.mxu0 %v1549
    %2297 = vmatprep.subr.bf16.mxu0 0
    %2298 = vmatpush1.bf16.msra.mxu0 %v1558
    %2299 = vmatprep.subr.bf16.mxu0 0
    %2300 = vmatpush1.bf16.msra.mxu0 %v1567
    %2301 = vmatprep.subr.bf16.mxu0 0
    %2302 = vmatpush1.bf16.msra.mxu0 %v1576
    %2303 = vmatprep.subr.bf16.mxu0 0
    %2304 = vmatpush1.bf16.msra.mxu0 %v1585
    %2305 = vmatprep.subr.bf16.mxu0 0
    %2306 = vmatpush1.bf16.msra.mxu0 %v1594
    %2307 = vmatprep.subr.bf16.mxu0 0
    %2308 = vmatpush1.bf16.msra.mxu0 %v1603
    %2309 = vmatprep.mubr.bf16.mxu0 %v99
    %2310 = vmatmul.mubr.bf16.gmra.mrb[0].mxu0 %v98
    %v2311 = vpop.f32.mrb[0].mxu0
    %v2312 = vadd.f32 %v2271, %v2311
    %v2313 = vpop.f32.mrb[0].mxu0
    %v2314 = vpop.f32.mrb[0].mxu0
    %v2315 = vadd.f32 %v2274, %v2314
    %v2316 = vpop.f32.mrb[0].mxu0
    %2317 = vdwg.mxu0
    %v2318 = vld [vmem:[#allocation4] sm:$0xff]
    %v2320 = vlaneseq
    %v2321 = vshrl.u32 %v2320, 7
    %v2322 = vsub.s32 0, %v2321
    %v2323 = vrot.slane %v2318, %v2322
    %v2324 = vlaneseq
    %v2325 = vshrl.u32 %v2324, 7
    %v2326 = vsub.s32 1, %v2325
    %v2327 = vrot.slane %v2318, %v2326
    %v2328 = vlaneseq
    %v2329 = vshrl.u32 %v2328, 7
    %v2330 = vsub.s32 2, %v2329
    %v2331 = vrot.slane %v2318, %v2330
    %v2332 = vlaneseq
    %v2333 = vshrl.u32 %v2332, 7
    %v2334 = vsub.s32 3, %v2333
    %v2335 = vrot.slane %v2318, %v2334
    %v2336 = vlaneseq
    %v2337 = vshrl.u32 %v2336, 7
    %v2338 = vsub.s32 4, %v2337
    %v2339 = vrot.slane %v2318, %v2338
    %v2340 = vlaneseq
    %v2341 = vshrl.u32 %v2340, 7
    %v2342 = vsub.s32 5, %v2341
    %v2343 = vrot.slane %v2318, %v2342
    %v2344 = vlaneseq
    %v2345 = vshrl.u32 %v2344, 7
    %v2346 = vsub.s32 6, %v2345
    %v2347 = vrot.slane %v2318, %v2346
    %v2348 = vlaneseq
    %v2349 = vshrl.u32 %v2348, 7
    %v2350 = vsub.s32 7, %v2349
    %v2351 = vrot.slane %v2318, %v2350
    %v2360 = vadd.f32 %v1970, %v2323
    %v2361 = vadd.f32 %v1972, %v2327
    %v2362 = vadd.f32 %v2056, %v2331
    %v2363 = vadd.f32 %v2058, %v2335
    %v2364 = vadd.f32 %v2142, %v2339
    %v2365 = vadd.f32 %v2144, %v2343
    %v2366 = vadd.f32 %v2228, %v2347
    %v2367 = vadd.f32 %v2230, %v2351
    %v2368 = vadd.f32 %v1974, %v2323
    %v2369 = vadd.f32 %v1976, %v2327
    %v2370 = vadd.f32 %v2060, %v2331
    %v2371 = vadd.f32 %v2062, %v2335
    %v2372 = vadd.f32 %v2146, %v2339
    %v2373 = vadd.f32 %v2148, %v2343
    %v2374 = vadd.f32 %v2232, %v2347
    %v2375 = vadd.f32 %v2234, %v2351
    %v2376 = vmax.f32 %v2360, 0.0
    %v2377 = vmax.f32 %v2361, 0.0
    %v2378 = vmax.f32 %v2362, 0.0
    %v2379 = vmax.f32 %v2363, 0.0
    %v2380 = vmax.f32 %v2364, 0.0
    %v2381 = vmax.f32 %v2365, 0.0
    %v2382 = vmax.f32 %v2366, 0.0
    %v2383 = vmax.f32 %v2367, 0.0
    %v2384 = vmax.f32 %v2368, 0.0
    %v2385 = vmax.f32 %v2369, 0.0
    %v2386 = vmax.f32 %v2370, 0.0
    %v2387 = vmax.f32 %v2371, 0.0
    %v2388 = vmax.f32 %v2372, 0.0
    %v2389 = vmax.f32 %v2373, 0.0
    %v2390 = vmax.f32 %v2374, 0.0
    %v2391 = vmax.f32 %v2375, 0.0
    %v2392 = vpack.c.bf16 %v2384, %v2376
    %v2393 = vpack.c.bf16 %v2385, %v2377
    %v2394 = vpack.c.bf16 %v2386, %v2378
    %v2395 = vpack.c.bf16 %v2387, %v2379
    %v2396 = vpack.c.bf16 %v2388, %v2380
    %v2397 = vpack.c.bf16 %v2389, %v2381
    %v2398 = vpack.c.bf16 %v2390, %v2382
    %v2399 = vpack.c.bf16 %v2391, %v2383
    %v2400 = vld [vmem:[#allocation6] sm:$0xf]
    %v2401 = vld [vmem:[#allocation6 + $0x4] sm:$0xf]
    %v2402 = vld [vmem:[#allocation6 + $0x8] sm:$0xf]
    %v2403 = vld [vmem:[#allocation6 + $0xc] sm:$0xf]
    %v2404 = vld [vmem:[#allocation6 + $0x10] sm:$0xf]
    %v2405 = vld [vmem:[#allocation6 + $0x14] sm:$0xf]
    %v2406 = vld [vmem:[#allocation6 + $0x18] sm:$0xf]
    %v2407 = vld [vmem:[#allocation6 + $0x1c] sm:$0xf]
    %v2408 = vld [vmem:[#allocation6 + $0x20] sm:$0xf]
    %v2409 = vld [vmem:[#allocation6 + $0x24] sm:$0xf]
    %v2410 = vld [vmem:[#allocation6 + $0x28] sm:$0xf]
    %v2411 = vld [vmem:[#allocation6 + $0x2c] sm:$0xf]
    %v2412 = vld [vmem:[#allocation6 + $0x30] sm:$0xf]
    %v2413 = vld [vmem:[#allocation6 + $0x34] sm:$0xf]
    %v2414 = vld [vmem:[#allocation6 + $0x38] sm:$0xf]
    %v2415 = vld [vmem:[#allocation6 + $0x3c] sm:$0xf]
    %v2416 = vld [vmem:[#allocation6 + $0x40] sm:$0xf]
    %v2417 = vld [vmem:[#allocation6 + $0x44] sm:$0xf]
    %v2418 = vld [vmem:[#allocation6 + $0x48] sm:$0xf]
    %v2419 = vld [vmem:[#allocation6 + $0x4c] sm:$0xf]
    %v2420 = vld [vmem:[#allocation6 + $0x50] sm:$0xf]
    %v2421 = vld [vmem:[#allocation6 + $0x54] sm:$0xf]
    %v2422 = vld [vmem:[#allocation6 + $0x58] sm:$0xf]
    %v2423 = vld [vmem:[#allocation6 + $0x5c] sm:$0xf]
    %v2424 = vld [vmem:[#allocation6 + $0x60] sm:$0xf]
    %v2425 = vld [vmem:[#allocation6 + $0x64] sm:$0xf]
    %v2426 = vld [vmem:[#allocation6 + $0x68] sm:$0xf]
    %v2427 = vld [vmem:[#allocation6 + $0x6c] sm:$0xf]
    %v2428 = vld [vmem:[#allocation6 + $0x70] sm:$0xf]
    %v2429 = vld [vmem:[#allocation6 + $0x74] sm:$0xf]
    %v2430 = vld [vmem:[#allocation6 + $0x78] sm:$0xf]
    %v2431 = vld [vmem:[#allocation6 + $0x7c] sm:$0xf]
    %v2432 = vld [vmem:[#allocation6 + $0x80] sm:$0xf]
    %v2433 = vld [vmem:[#allocation6 + $0x84] sm:$0xf]
    %v2434 = vld [vmem:[#allocation6 + $0x88] sm:$0xf]
    %v2435 = vld [vmem:[#allocation6 + $0x8c] sm:$0xf]
    %v2436 = vld [vmem:[#allocation6 + $0x90] sm:$0xf]
    %v2437 = vld [vmem:[#allocation6 + $0x94] sm:$0xf]
    %v2438 = vld [vmem:[#allocation6 + $0x98] sm:$0xf]
    %v2439 = vld [vmem:[#allocation6 + $0x9c] sm:$0xf]
    %v2440 = vld [vmem:[#allocation6 + $0xa0] sm:$0xf]
    %v2441 = vld [vmem:[#allocation6 + $0xa4] sm:$0xf]
    %v2442 = vld [vmem:[#allocation6 + $0xa8] sm:$0xf]
    %v2443 = vld [vmem:[#allocation6 + $0xac] sm:$0xf]
    %v2444 = vld [vmem:[#allocation6 + $0xb0] sm:$0xf]
    %v2445 = vld [vmem:[#allocation6 + $0xb4] sm:$0xf]
    %v2446 = vld [vmem:[#allocation6 + $0xb8] sm:$0xf]
    %v2447 = vld [vmem:[#allocation6 + $0xbc] sm:$0xf]
    %v2448 = vld [vmem:[#allocation6 + $0xc0] sm:$0xf]
    %v2449 = vld [vmem:[#allocation6 + $0xc4] sm:$0xf]
    %v2450 = vld [vmem:[#allocation6 + $0xc8] sm:$0xf]
    %v2451 = vld [vmem:[#allocation6 + $0xcc] sm:$0xf]
    %v2452 = vld [vmem:[#allocation6 + $0xd0] sm:$0xf]
    %v2453 = vld [vmem:[#allocation6 + $0xd4] sm:$0xf]
    %v2454 = vld [vmem:[#allocation6 + $0xd8] sm:$0xf]
    %v2455 = vld [vmem:[#allocation6 + $0xdc] sm:$0xf]
    %v2456 = vld [vmem:[#allocation6 + $0xe0] sm:$0xf]
    %v2457 = vld [vmem:[#allocation6 + $0xe4] sm:$0xf]
    %v2458 = vld [vmem:[#allocation6 + $0xe8] sm:$0xf]
    %v2459 = vld [vmem:[#allocation6 + $0xec] sm:$0xf]
    %v2460 = vld [vmem:[#allocation6 + $0xf0] sm:$0xf]
    %v2461 = vld [vmem:[#allocation6 + $0xf4] sm:$0xf]
    %v2462 = vld [vmem:[#allocation6 + $0xf8] sm:$0xf]
    %v2463 = vld [vmem:[#allocation6 + $0xfc] sm:$0xf]
    %v2464 = vld [vmem:[#allocation6 + $0x100] sm:$0xf]
    %v2465 = vld [vmem:[#allocation6 + $0x104] sm:$0xf]
    %v2466 = vld [vmem:[#allocation6 + $0x108] sm:$0xf]
    %v2467 = vld [vmem:[#allocation6 + $0x10c] sm:$0xf]
    %v2468 = vld [vmem:[#allocation6 + $0x110] sm:$0xf]
    %v2469 = vld [vmem:[#allocation6 + $0x114] sm:$0xf]
    %v2470 = vld [vmem:[#allocation6 + $0x118] sm:$0xf]
    %v2471 = vld [vmem:[#allocation6 + $0x11c] sm:$0xf]
    %v2472 = vld [vmem:[#allocation6 + $0x120] sm:$0xf]
    %v2473 = vld [vmem:[#allocation6 + $0x124] sm:$0xf]
    %v2474 = vld [vmem:[#allocation6 + $0x128] sm:$0xf]
    %v2475 = vld [vmem:[#allocation6 + $0x12c] sm:$0xf]
    %v2476 = vld [vmem:[#allocation6 + $0x130] sm:$0xf]
    %v2477 = vld [vmem:[#allocation6 + $0x134] sm:$0xf]
    %v2478 = vld [vmem:[#allocation6 + $0x138] sm:$0xf]
    %v2479 = vld [vmem:[#allocation6 + $0x13c] sm:$0xf]
    %v2480 = vld [vmem:[#allocation6 + $0x140] sm:$0xf]
    %v2481 = vld [vmem:[#allocation6 + $0x144] sm:$0xf]
    %v2482 = vld [vmem:[#allocation6 + $0x148] sm:$0xf]
    %v2483 = vld [vmem:[#allocation6 + $0x14c] sm:$0xf]
    %v2484 = vld [vmem:[#allocation6 + $0x150] sm:$0xf]
    %v2485 = vld [vmem:[#allocation6 + $0x154] sm:$0xf]
    %v2486 = vld [vmem:[#allocation6 + $0x158] sm:$0xf]
    %v2487 = vld [vmem:[#allocation6 + $0x15c] sm:$0xf]
    %v2488 = vld [vmem:[#allocation6 + $0x160] sm:$0xf]
    %v2489 = vld [vmem:[#allocation6 + $0x164] sm:$0xf]
    %v2490 = vld [vmem:[#allocation6 + $0x168] sm:$0xf]
    %v2491 = vld [vmem:[#allocation6 + $0x16c] sm:$0xf]
    %v2492 = vld [vmem:[#allocation6 + $0x170] sm:$0xf]
    %v2493 = vld [vmem:[#allocation6 + $0x174] sm:$0xf]
    %v2494 = vld [vmem:[#allocation6 + $0x178] sm:$0xf]
    %v2495 = vld [vmem:[#allocation6 + $0x17c] sm:$0xf]
    %v2496 = vld [vmem:[#allocation6 + $0x180] sm:$0xf]
    %v2497 = vld [vmem:[#allocation6 + $0x184] sm:$0xf]
    %v2498 = vld [vmem:[#allocation6 + $0x188] sm:$0xf]
    %v2499 = vld [vmem:[#allocation6 + $0x18c] sm:$0xf]
    %v2500 = vld [vmem:[#allocation6 + $0x190] sm:$0xf]
    %v2501 = vld [vmem:[#allocation6 + $0x194] sm:$0xf]
    %v2502 = vld [vmem:[#allocation6 + $0x198] sm:$0xf]
    %v2503 = vld [vmem:[#allocation6 + $0x19c] sm:$0xf]
    %v2504 = vld [vmem:[#allocation6 + $0x1a0] sm:$0xf]
    %v2505 = vld [vmem:[#allocation6 + $0x1a4] sm:$0xf]
    %v2506 = vld [vmem:[#allocation6 + $0x1a8] sm:$0xf]
    %v2507 = vld [vmem:[#allocation6 + $0x1ac] sm:$0xf]
    %v2508 = vld [vmem:[#allocation6 + $0x1b0] sm:$0xf]
    %v2509 = vld [vmem:[#allocation6 + $0x1b4] sm:$0xf]
    %v2510 = vld [vmem:[#allocation6 + $0x1b8] sm:$0xf]
    %v2511 = vld [vmem:[#allocation6 + $0x1bc] sm:$0xf]
    %v2512 = vld [vmem:[#allocation6 + $0x1c0] sm:$0xf]
    %v2513 = vld [vmem:[#allocation6 + $0x1c4] sm:$0xf]
    %v2514 = vld [vmem:[#allocation6 + $0x1c8] sm:$0xf]
    %v2515 = vld [vmem:[#allocation6 + $0x1cc] sm:$0xf]
    %v2516 = vld [vmem:[#allocation6 + $0x1d0] sm:$0xf]
    %v2517 = vld [vmem:[#allocation6 + $0x1d4] sm:$0xf]
    %v2518 = vld [vmem:[#allocation6 + $0x1d8] sm:$0xf]
    %v2519 = vld [vmem:[#allocation6 + $0x1dc] sm:$0xf]
    %v2520 = vld [vmem:[#allocation6 + $0x1e0] sm:$0xf]
    %v2521 = vld [vmem:[#allocation6 + $0x1e4] sm:$0xf]
    %v2522 = vld [vmem:[#allocation6 + $0x1e8] sm:$0xf]
    %v2523 = vld [vmem:[#allocation6 + $0x1ec] sm:$0xf]
    %v2524 = vld [vmem:[#allocation6 + $0x1f0] sm:$0xf]
    %v2525 = vld [vmem:[#allocation6 + $0x1f4] sm:$0xf]
    %v2526 = vld [vmem:[#allocation6 + $0x1f8] sm:$0xf]
    %v2527 = vld [vmem:[#allocation6 + $0x1fc] sm:$0xf]
    %v2528 = vld [vmem:[#allocation7] sm:$0x1]
    %v2530 = vlaneseq
    %v2531 = vshrl.u32 %v2530, 7
    %v2532 = vsub.s32 0, %v2531
    %v2533 = vrot.slane %v2528, %v2532
    %v2663 = vunpack.c.l.b16 %v2400
    %v2664 = vunpack.c.l.b16 %v2401
    %v2665 = vunpack.c.l.b16 %v2402
    %v2666 = vunpack.c.l.b16 %v2403
    %v2667 = vunpack.c.l.b16 %v2404
    %v2668 = vunpack.c.l.b16 %v2405
    %v2669 = vunpack.c.l.b16 %v2406
    %v2670 = vunpack.c.l.b16 %v2407
    %v2671 = vunpack.c.l.b16 %v2408
    %v2672 = vunpack.c.l.b16 %v2409
    %v2673 = vunpack.c.l.b16 %v2410
    %v2674 = vunpack.c.l.b16 %v2411
    %v2675 = vunpack.c.l.b16 %v2412
    %v2676 = vunpack.c.l.b16 %v2413
    %v2677 = vunpack.c.l.b16 %v2414
    %v2678 = vunpack.c.l.b16 %v2415
    %v2679 = vunpack.c.l.b16 %v2416
    %v2680 = vunpack.c.l.b16 %v2417
    %v2681 = vunpack.c.l.b16 %v2418
    %v2682 = vunpack.c.l.b16 %v2419
    %v2683 = vunpack.c.l.b16 %v2420
    %v2684 = vunpack.c.l.b16 %v2421
    %v2685 = vunpack.c.l.b16 %v2422
    %v2686 = vunpack.c.l.b16 %v2423
    %v2687 = vunpack.c.l.b16 %v2424
    %v2688 = vunpack.c.l.b16 %v2425
    %v2689 = vunpack.c.l.b16 %v2426
    %v2690 = vunpack.c.l.b16 %v2427
    %v2691 = vunpack.c.l.b16 %v2428
    %v2692 = vunpack.c.l.b16 %v2429
    %v2693 = vunpack.c.l.b16 %v2430
    %v2694 = vunpack.c.l.b16 %v2431
    %v2695 = vunpack.c.l.b16 %v2432
    %v2696 = vunpack.c.l.b16 %v2433
    %v2697 = vunpack.c.l.b16 %v2434
    %v2698 = vunpack.c.l.b16 %v2435
    %v2699 = vunpack.c.l.b16 %v2436
    %v2700 = vunpack.c.l.b16 %v2437
    %v2701 = vunpack.c.l.b16 %v2438
    %v2702 = vunpack.c.l.b16 %v2439
    %v2703 = vunpack.c.l.b16 %v2440
    %v2704 = vunpack.c.l.b16 %v2441
    %v2705 = vunpack.c.l.b16 %v2442
    %v2706 = vunpack.c.l.b16 %v2443
    %v2707 = vunpack.c.l.b16 %v2444
    %v2708 = vunpack.c.l.b16 %v2445
    %v2709 = vunpack.c.l.b16 %v2446
    %v2710 = vunpack.c.l.b16 %v2447
    %v2711 = vunpack.c.l.b16 %v2448
    %v2712 = vunpack.c.l.b16 %v2449
    %v2713 = vunpack.c.l.b16 %v2450
    %v2714 = vunpack.c.l.b16 %v2451
    %v2715 = vunpack.c.l.b16 %v2452
    %v2716 = vunpack.c.l.b16 %v2453
    %v2717 = vunpack.c.l.b16 %v2454
    %v2718 = vunpack.c.l.b16 %v2455
    %v2719 = vunpack.c.l.b16 %v2456
    %v2720 = vunpack.c.l.b16 %v2457
    %v2721 = vunpack.c.l.b16 %v2458
    %v2722 = vunpack.c.l.b16 %v2459
    %v2723 = vunpack.c.l.b16 %v2460
    %v2724 = vunpack.c.l.b16 %v2461
    %v2725 = vunpack.c.l.b16 %v2462
    %v2726 = vunpack.c.l.b16 %v2463
    %v2727 = vunpack.c.l.b16 %v2464
    %v2728 = vunpack.c.l.b16 %v2465
    %v2729 = vunpack.c.l.b16 %v2466
    %v2730 = vunpack.c.l.b16 %v2467
    %v2731 = vunpack.c.l.b16 %v2468
    %v2732 = vunpack.c.l.b16 %v2469
    %v2733 = vunpack.c.l.b16 %v2470
    %v2734 = vunpack.c.l.b16 %v2471
    %v2735 = vunpack.c.l.b16 %v2472
    %v2736 = vunpack.c.l.b16 %v2473
    %v2737 = vunpack.c.l.b16 %v2474
    %v2738 = vunpack.c.l.b16 %v2475
    %v2739 = vunpack.c.l.b16 %v2476
    %v2740 = vunpack.c.l.b16 %v2477
    %v2741 = vunpack.c.l.b16 %v2478
    %v2742 = vunpack.c.l.b16 %v2479
    %v2743 = vunpack.c.l.b16 %v2480
    %v2744 = vunpack.c.l.b16 %v2481
    %v2745 = vunpack.c.l.b16 %v2482
    %v2746 = vunpack.c.l.b16 %v2483
    %v2747 = vunpack.c.l.b16 %v2484
    %v2748 = vunpack.c.l.b16 %v2485
    %v2749 = vunpack.c.l.b16 %v2486
    %v2750 = vunpack.c.l.b16 %v2487
    %v2751 = vunpack.c.l.b16 %v2488
    %v2752 = vunpack.c.l.b16 %v2489
    %v2753 = vunpack.c.l.b16 %v2490
    %v2754 = vunpack.c.l.b16 %v2491
    %v2755 = vunpack.c.l.b16 %v2492
    %v2756 = vunpack.c.l.b16 %v2493
    %v2757 = vunpack.c.l.b16 %v2494
    %v2758 = vunpack.c.l.b16 %v2495
    %v2759 = vunpack.c.l.b16 %v2496
    %v2760 = vunpack.c.l.b16 %v2497
    %v2761 = vunpack.c.l.b16 %v2498
    %v2762 = vunpack.c.l.b16 %v2499
    %v2763 = vunpack.c.l.b16 %v2500
    %v2764 = vunpack.c.l.b16 %v2501
    %v2765 = vunpack.c.l.b16 %v2502
    %v2766 = vunpack.c.l.b16 %v2503
    %v2767 = vunpack.c.l.b16 %v2504
    %v2768 = vunpack.c.l.b16 %v2505
    %v2769 = vunpack.c.l.b16 %v2506
    %v2770 = vunpack.c.l.b16 %v2507
    %v2771 = vunpack.c.l.b16 %v2508
    %v2772 = vunpack.c.l.b16 %v2509
    %v2773 = vunpack.c.l.b16 %v2510
    %v2774 = vunpack.c.l.b16 %v2511
    %v2775 = vunpack.c.l.b16 %v2512
    %v2776 = vunpack.c.l.b16 %v2513
    %v2777 = vunpack.c.l.b16 %v2514
    %v2778 = vunpack.c.l.b16 %v2515
    %v2779 = vunpack.c.l.b16 %v2516
    %v2780 = vunpack.c.l.b16 %v2517
    %v2781 = vunpack.c.l.b16 %v2518
    %v2782 = vunpack.c.l.b16 %v2519
    %v2783 = vunpack.c.l.b16 %v2520
    %v2784 = vunpack.c.l.b16 %v2521
    %v2785 = vunpack.c.l.b16 %v2522
    %v2786 = vunpack.c.l.b16 %v2523
    %v2787 = vunpack.c.l.b16 %v2524
    %v2788 = vunpack.c.l.b16 %v2525
    %v2789 = vunpack.c.l.b16 %v2526
    %v2790 = vunpack.c.l.b16 %v2527
    %v2791 = vpack.c.b16 %v2664, %v2663
    %v2792 = vpack.c.b16 %v2666, %v2665
    %v2793 = vpack.c.b16 %v2668, %v2667
    %v2794 = vpack.c.b16 %v2670, %v2669
    %v2795 = vpack.c.b16 %v2672, %v2671
    %v2796 = vpack.c.b16 %v2674, %v2673
    %v2797 = vpack.c.b16 %v2676, %v2675
    %v2798 = vpack.c.b16 %v2678, %v2677
    %v2799 = vpack.c.b16 %v2680, %v2679
    %v2800 = vpack.c.b16 %v2682, %v2681
    %v2801 = vpack.c.b16 %v2684, %v2683
    %v2802 = vpack.c.b16 %v2686, %v2685
    %v2803 = vpack.c.b16 %v2688, %v2687
    %v2804 = vpack.c.b16 %v2690, %v2689
    %v2805 = vpack.c.b16 %v2692, %v2691
    %v2806 = vpack.c.b16 %v2694, %v2693
    %v2807 = vpack.c.b16 %v2696, %v2695
    %v2808 = vpack.c.b16 %v2698, %v2697
    %v2809 = vpack.c.b16 %v2700, %v2699
    %v2810 = vpack.c.b16 %v2702, %v2701
    %v2811 = vpack.c.b16 %v2704, %v2703
    %v2812 = vpack.c.b16 %v2706, %v2705
    %v2813 = vpack.c.b16 %v2708, %v2707
    %v2814 = vpack.c.b16 %v2710, %v2709
    %v2815 = vpack.c.b16 %v2712, %v2711
    %v2816 = vpack.c.b16 %v2714, %v2713
    %v2817 = vpack.c.b16 %v2716, %v2715
    %v2818 = vpack.c.b16 %v2718, %v2717
    %v2819 = vpack.c.b16 %v2720, %v2719
    %v2820 = vpack.c.b16 %v2722, %v2721
    %v2821 = vpack.c.b16 %v2724, %v2723
    %v2822 = vpack.c.b16 %v2726, %v2725
    %v2823 = vpack.c.b16 %v2728, %v2727
    %v2824 = vpack.c.b16 %v2730, %v2729
    %v2825 = vpack.c.b16 %v2732, %v2731
    %v2826 = vpack.c.b16 %v2734, %v2733
    %v2827 = vpack.c.b16 %v2736, %v2735
    %v2828 = vpack.c.b16 %v2738, %v2737
    %v2829 = vpack.c.b16 %v2740, %v2739
    %v2830 = vpack.c.b16 %v2742, %v2741
    %v2831 = vpack.c.b16 %v2744, %v2743
    %v2832 = vpack.c.b16 %v2746, %v2745
    %v2833 = vpack.c.b16 %v2748, %v2747
    %v2834 = vpack.c.b16 %v2750, %v2749
    %v2835 = vpack.c.b16 %v2752, %v2751
    %v2836 = vpack.c.b16 %v2754, %v2753
    %v2837 = vpack.c.b16 %v2756, %v2755
    %v2838 = vpack.c.b16 %v2758, %v2757
    %v2839 = vpack.c.b16 %v2760, %v2759
    %v2840 = vpack.c.b16 %v2762, %v2761
    %v2841 = vpack.c.b16 %v2764, %v2763
    %v2842 = vpack.c.b16 %v2766, %v2765
    %v2843 = vpack.c.b16 %v2768, %v2767
    %v2844 = vpack.c.b16 %v2770, %v2769
    %v2845 = vpack.c.b16 %v2772, %v2771
    %v2846 = vpack.c.b16 %v2774, %v2773
    %v2847 = vpack.c.b16 %v2776, %v2775
    %v2848 = vpack.c.b16 %v2778, %v2777
    %v2849 = vpack.c.b16 %v2780, %v2779
    %v2850 = vpack.c.b16 %v2782, %v2781
    %v2851 = vpack.c.b16 %v2784, %v2783
    %v2852 = vpack.c.b16 %v2786, %v2785
    %v2853 = vpack.c.b16 %v2788, %v2787
    %v2854 = vpack.c.b16 %v2790, %v2789
    %2919 = vmatprep.subr.bf16.mxu0 0
    %2920 = vmatpush1.bf16.msra.mxu0 %v2791
    %2921 = vmatprep.subr.bf16.mxu0 0
    %2922 = vmatpush1.bf16.msra.mxu0 %v2792
    %2923 = vmatprep.subr.bf16.mxu0 0
    %2924 = vmatpush1.bf16.msra.mxu0 %v2793
    %2925 = vmatprep.subr.bf16.mxu0 0
    %2926 = vmatpush1.bf16.msra.mxu0 %v2794
    %2927 = vmatprep.subr.bf16.mxu0 0
    %2928 = vmatpush1.bf16.msra.mxu0 %v2795
    %2929 = vmatprep.subr.bf16.mxu0 0
    %2930 = vmatpush1.bf16.msra.mxu0 %v2796
    %2931 = vmatprep.subr.bf16.mxu0 0
    %2932 = vmatpush1.bf16.msra.mxu0 %v2797
    %2933 = vmatprep.subr.bf16.mxu0 0
    %2934 = vmatpush1.bf16.msra.mxu0 %v2798
    %2935 = vmatprep.subr.bf16.mxu0 0
    %2936 = vmatpush1.bf16.msra.mxu0 %v2799
    %2937 = vmatprep.subr.bf16.mxu0 0
    %2938 = vmatpush1.bf16.msra.mxu0 %v2800
    %2939 = vmatprep.subr.bf16.mxu0 0
    %2940 = vmatpush1.bf16.msra.mxu0 %v2801
    %2941 = vmatprep.subr.bf16.mxu0 0
    %2942 = vmatpush1.bf16.msra.mxu0 %v2802
    %2943 = vmatprep.subr.bf16.mxu0 0
    %2944 = vmatpush1.bf16.msra.mxu0 %v2803
    %2945 = vmatprep.subr.bf16.mxu0 0
    %2946 = vmatpush1.bf16.msra.mxu0 %v2804
    %2947 = vmatprep.subr.bf16.mxu0 0
    %2948 = vmatpush1.bf16.msra.mxu0 %v2805
    %2949 = vmatprep.subr.bf16.mxu0 0
    %2950 = vmatpush1.bf16.msra.mxu0 %v2806
    %2951 = vmatprep.mubr.bf16.mxu0 %v2393
    %2952 = vmatmul.mubr.bf16.gmra.mrb[0].mxu0 %v2392
    %v2953 = vpop.f32.mrb[0].mxu0
    %v2954 = vadd.f32 %v2533, %v2953
    %v2955 = vpop.f32.mrb[0].mxu0
    %v2956 = vpop.f32.mrb[0].mxu0
    %v2957 = vadd.f32 %v2533, %v2956
    %v2958 = vpop.f32.mrb[0].mxu0
    %2959 = vdwg.mxu0
    %2960 = vmatprep.subr.bf16.mxu0 0
    %2961 = vmatpush1.bf16.msra.mxu0 %v2807
    %2962 = vmatprep.subr.bf16.mxu0 0
    %2963 = vmatpush1.bf16.msra.mxu0 %v2808
    %2964 = vmatprep.subr.bf16.mxu0 0
    %2965 = vmatpush1.bf16.msra.mxu0 %v2809
    %2966 = vmatprep.subr.bf16.mxu0 0
    %2967 = vmatpush1.bf16.msra.mxu0 %v2810
    %2968 = vmatprep.subr.bf16.mxu0 0
    %2969 = vmatpush1.bf16.msra.mxu0 %v2811
    %2970 = vmatprep.subr.bf16.mxu0 0
    %2971 = vmatpush1.bf16.msra.mxu0 %v2812
    %2972 = vmatprep.subr.bf16.mxu0 0
    %2973 = vmatpush1.bf16.msra.mxu0 %v2813
    %2974 = vmatprep.subr.bf16.mxu0 0
    %2975 = vmatpush1.bf16.msra.mxu0 %v2814
    %2976 = vmatprep.subr.bf16.mxu0 0
    %2977 = vmatpush1.bf16.msra.mxu0 %v2815
    %2978 = vmatprep.subr.bf16.mxu0 0
    %2979 = vmatpush1.bf16.msra.mxu0 %v2816
    %2980 = vmatprep.subr.bf16.mxu0 0
    %2981 = vmatpush1.bf16.msra.mxu0 %v2817
    %2982 = vmatprep.subr.bf16.mxu0 0
    %2983 = vmatpush1.bf16.msra.mxu0 %v2818
    %2984 = vmatprep.subr.bf16.mxu0 0
    %2985 = vmatpush1.bf16.msra.mxu0 %v2819
    %2986 = vmatprep.subr.bf16.mxu0 0
    %2987 = vmatpush1.bf16.msra.mxu0 %v2820
    %2988 = vmatprep.subr.bf16.mxu0 0
    %2989 = vmatpush1.bf16.msra.mxu0 %v2821
    %2990 = vmatprep.subr.bf16.mxu0 0
    %2991 = vmatpush1.bf16.msra.mxu0 %v2822
    %2992 = vmatprep.mubr.bf16.mxu0 %v2395
    %2993 = vmatmul.mubr.bf16.gmra.mrb[0].mxu0 %v2394
    %v2994 = vpop.f32.mrb[0].mxu0
    %v2995 = vadd.f32 %v2954, %v2994
    %v2996 = vpop.f32.mrb[0].mxu0
    %v2997 = vpop.f32.mrb[0].mxu0
    %v2998 = vadd.f32 %v2957, %v2997
    %v2999 = vpop.f32.mrb[0].mxu0
    %3000 = vdwg.mxu0
    %3001 = vmatprep.subr.bf16.mxu0 0
    %3002 = vmatpush1.bf16.msra.mxu0 %v2823
    %3003 = vmatprep.subr.bf16.mxu0 0
    %3004 = vmatpush1.bf16.msra.mxu0 %v2824
    %3005 = vmatprep.subr.bf16.mxu0 0
    %3006 = vmatpush1.bf16.msra.mxu0 %v2825
    %3007 = vmatprep.subr.bf16.mxu0 0
    %3008 = vmatpush1.bf16.msra.mxu0 %v2826
    %3009 = vmatprep.subr.bf16.mxu0 0
    %3010 = vmatpush1.bf16.msra.mxu0 %v2827
    %3011 = vmatprep.subr.bf16.mxu0 0
    %3012 = vmatpush1.bf16.msra.mxu0 %v2828
    %3013 = vmatprep.subr.bf16.mxu0 0
    %3014 = vmatpush1.bf16.msra.mxu0 %v2829
    %3015 = vmatprep.subr.bf16.mxu0 0
    %3016 = vmatpush1.bf16.msra.mxu0 %v2830
    %3017 = vmatprep.subr.bf16.mxu0 0
    %3018 = vmatpush1.bf16.msra.mxu0 %v2831
    %3019 = vmatprep.subr.bf16.mxu0 0
    %3020 = vmatpush1.bf16.msra.mxu0 %v2832
    %3021 = vmatprep.subr.bf16.mxu0 0
    %3022 = vmatpush1.bf16.msra.mxu0 %v2833
    %3023 = vmatprep.subr.bf16.mxu0 0
    %3024 = vmatpush1.bf16.msra.mxu0 %v2834
    %3025 = vmatprep.subr.bf16.mxu0 0
    %3026 = vmatpush1.bf16.msra.mxu0 %v2835
    %3027 = vmatprep.subr.bf16.mxu0 0
    %3028 = vmatpush1.bf16.msra.mxu0 %v2836
    %3029 = vmatprep.subr.bf16.mxu0 0
    %3030 = vmatpush1.bf16.msra.mxu0 %v2837
    %3031 = vmatprep.subr.bf16.mxu0 0
    %3032 = vmatpush1.bf16.msra.mxu0 %v2838
    %3033 = vmatprep.mubr.bf16.mxu0 %v2397
    %3034 = vmatmul.mubr.bf16.gmra.mrb[0].mxu0 %v2396
    %v3035 = vpop.f32.mrb[0].mxu0
    %v3036 = vadd.f32 %v2995, %v3035
    %v3037 = vpop.f32.mrb[0].mxu0
    %v3038 = vpop.f32.mrb[0].mxu0
    %v3039 = vadd.f32 %v2998, %v3038
    %v3040 = vpop.f32.mrb[0].mxu0
    %3041 = vdwg.mxu0
    %3042 = vmatprep.subr.bf16.mxu0 0
    %3043 = vmatpush1.bf16.msra.mxu0 %v2839
    %3044 = vmatprep.subr.bf16.mxu0 0
    %3045 = vmatpush1.bf16.msra.mxu0 %v2840
    %3046 = vmatprep.subr.bf16.mxu0 0
    %3047 = vmatpush1.bf16.msra.mxu0 %v2841
    %3048 = vmatprep.subr.bf16.mxu0 0
    %3049 = vmatpush1.bf16.msra.mxu0 %v2842
    %3050 = vmatprep.subr.bf16.mxu0 0
    %3051 = vmatpush1.bf16.msra.mxu0 %v2843
    %3052 = vmatprep.subr.bf16.mxu0 0
    %3053 = vmatpush1.bf16.msra.mxu0 %v2844
    %3054 = vmatprep.subr.bf16.mxu0 0
    %3055 = vmatpush1.bf16.msra.mxu0 %v2845
    %3056 = vmatprep.subr.bf16.mxu0 0
    %3057 = vmatpush1.bf16.msra.mxu0 %v2846
    %3058 = vmatprep.subr.bf16.mxu0 0
    %3059 = vmatpush1.bf16.msra.mxu0 %v2847
    %3060 = vmatprep.subr.bf16.mxu0 0
    %3061 = vmatpush1.bf16.msra.mxu0 %v2848
    %3062 = vmatprep.subr.bf16.mxu0 0
    %3063 = vmatpush1.bf16.msra.mxu0 %v2849
    %3064 = vmatprep.subr.bf16.mxu0 0
    %3065 = vmatpush1.bf16.msra.mxu0 %v2850
    %3066 = vmatprep.subr.bf16.mxu0 0
    %3067 = vmatpush1.bf16.msra.mxu0 %v2851
    %3068 = vmatprep.subr.bf16.mxu0 0
    %3069 = vmatpush1.bf16.msra.mxu0 %v2852
    %3070 = vmatprep.subr.bf16.mxu0 0
    %3071 = vmatpush1.bf16.msra.mxu0 %v2853
    %3072 = vmatprep.subr.bf16.mxu0 0
    %3073 = vmatpush1.bf16.msra.mxu0 %v2854
    %3074 = vmatprep.mubr.bf16.mxu0 %v2399
    %3075 = vmatmul.mubr.bf16.gmra.mrb[0].mxu0 %v2398
    %v3076 = vpop.f32.mrb[0].mxu0
    %v3077 = vadd.f32 %v3036, %v3076
    %v3078 = vpop.f32.mrb[0].mxu0
    %v3079 = vpop.f32.mrb[0].mxu0
    %v3080 = vadd.f32 %v3039, %v3079
    %v3081 = vpop.f32.mrb[0].mxu0
    %3082 = vdwg.mxu0
    %v3083 = vpack.c.bf16 %v3080, %v3077
    %v3085 = vunpack.c.l.b16 %v3083
    %v3086 = vunpack.c.h.b16 %v3083
    %v3087 = vpack.c.b16 %v3085, %v3085
    %v3088 = vpack.c.b16 %v3086, %v3086
    %3091 = vst [vmem:[%s6] sm:$0xf] %v3087
    %3092 = vst [vmem:[%s6 + $0x4] sm:$0xf] %v3088
    %v3093 = vld [vmem:[#allocation9] sm:$0x1]
    %v3095 = vlaneseq
    %v3096 = vshrl.u32 %v3095, 7
    %v3097 = vsub.s32 0, %v3096
    %v3098 = vrot.slane %v3093, %v3097
    %v3100 = vadd.f32 %v2312, %v3098
    %v3101 = vadd.f32 %v2315, %v3098
    %v3102 = vpack.c.bf16 %v3101, %v3100
    %v3104 = vunpack.c.l.b16 %v3102
    %v3105 = vunpack.c.h.b16 %v3102
    %v3106 = vpack.c.b16 %v3104, %v3104
    %v3107 = vpack.c.b16 %v3105, %v3105
    %3110 = vst [vmem:[%s7] sm:$0xf] %v3106
    %3111 = vst [vmem:[%s7 + $0x4] sm:$0xf] %v3107
    // Predicated region
    $region46: #{evaluator_forward.1} parent=1 // pred_check
      _
    $region47: #{evaluator_forward.1} parent=1 // pred_check_branch
      %3113 = sbr.rel (0) target = $region49
    $region48: #{evaluator_forward.1} parent=1 // pred_region
      _
    $region49: #{evaluator_forward.1} parent=1 // pred_fallthru
      _
    // Predicated region
    $region50: #{evaluator_forward.1} parent=1 // pred_check
      _
    $region51: #{evaluator_forward.1} parent=1 // pred_check_branch
      %3115 = sbr.rel (0) target = $region53
    $region52: #{evaluator_forward.1} parent=1 // pred_region
      _
    $region53: #{evaluator_forward.1} parent=1 // pred_fallthru
      _
    // Predicated region
    $region54: #{evaluator_forward.1} parent=1 // pred_check
      _
    $region55: #{evaluator_forward.1} parent=1 // pred_check_branch
      %3117 = sbr.rel (0) target = $region57
    $region56: #{evaluator_forward.1} parent=1 // pred_region
      _
    $region57: #{evaluator_forward.1} parent=1 // pred_fallthru
      _
    // Predicated region
    $region58: #{evaluator_forward.1} parent=1 // pred_check
      _
    $region59: #{evaluator_forward.1} parent=1 // pred_check_branch
      %3119 = sbr.rel (0) target = $region61
    $region60: #{evaluator_forward.1} parent=1 // pred_region
      _
    $region61: #{evaluator_forward.1} parent=1 // pred_fallthru
      _
    %3120 = vsyncpa [#allocation3], 1
    %3121 = vsyncpa [#allocation5], 1
    %3122 = vsyncpa [#allocation8], 1

</llo_original>
